<compile_context>
chip_gen: v7x
topology: tpu7x:2x2x1
jax: 0.10.0
libtpu: 0.0.40
codegen_flags: <defaults>
</compile_context>

<pallas_src>
from functools import partial

import jax
import jax.numpy as jnp
from jax.experimental import pallas as pl
from jax.experimental.pallas import tpu as pltpu

HIDDEN0 = 512
HIDDEN1 = 1024


def _round_up(a, m):
    return (a + m - 1) // m * m


def _decoder_kernel(x_ref, y_ref, w1_ref, b1_ref, w2_ref, b2_ref, w3_ref, b3_ref,
                    o_ref, *, num_classes, in_features):
    # x_ref:  (TB, num_classes * in_features) f32 (row = [cls0 feats, cls1 feats, ...])
    # y_ref:  (TB, 1) int32 class index per row
    # w*_ref: (in, out) bf16 pre-transposed weights, b*_ref: (1, out) f32
    x_flat = x_ref[...]
    y_blk = y_ref[...]
    tb = x_flat.shape[0]

    # In-kernel class-row gather: select the chosen class' feature chunk per row.
    x_sel = jnp.zeros((tb, in_features), jnp.float32)
    for c in range(num_classes):
        chunk = x_flat[:, c * in_features:(c + 1) * in_features]
        x_sel = x_sel + jnp.where(y_blk == c, chunk, 0.0)

    h1 = jnp.dot(x_sel.astype(jnp.bfloat16), w1_ref[...],
                 preferred_element_type=jnp.float32) + b1_ref[...]
    h1 = jnp.maximum(h1, 0.0)

    h2 = jnp.dot(h1.astype(jnp.bfloat16), w2_ref[...],
                 preferred_element_type=jnp.float32) + b2_ref[...]
    h2 = jnp.maximum(h2, 0.0)

    logits = jnp.dot(h2.astype(jnp.bfloat16), w3_ref[...],
                     preferred_element_type=jnp.float32) + b3_ref[...]
    o_ref[...] = jax.nn.sigmoid(logits)


def decoder_forward(x, y, prep, output_size):
    """x: (B, num_classes, in_features) f32, y: (B,) int class indices.

    `prep` is the output of prepare_decoder_params (weights already transposed,
    bf16-cast and lane-padded — done once, not per call)."""
    B, num_classes, in_features = x.shape
    out_features = prep["out_features"]
    out_pad = prep["w3t"].shape[1]

    # Batch tiling: at least 8 rows (f32 sublane), 256-row tiles for big batches.
    TB = 256 if B >= 256 else _round_up(max(B, 1), 8)
    B_pad = _round_up(B, TB)

    x_flat = x.reshape(B, num_classes * in_features)
    y2 = y.reshape(B, 1).astype(jnp.int32)
    if B_pad != B:
        x_flat = jnp.pad(x_flat, ((0, B_pad - B), (0, 0)))
        y2 = jnp.pad(y2, ((0, B_pad - B), (0, 0)))

    kernel = partial(_decoder_kernel, num_classes=num_classes,
                     in_features=in_features)
    resident = lambda shp: pl.BlockSpec(shp, lambda i: (0,) * len(shp))

    out = pl.pallas_call(
        kernel,
        out_shape=jax.ShapeDtypeStruct((B_pad, out_pad), jnp.float32),
        grid=(B_pad // TB,),
        in_specs=[
            pl.BlockSpec((TB, num_classes * in_features), lambda i: (i, 0)),
            pl.BlockSpec((TB, 1), lambda i: (i, 0)),
            resident(prep["w1t"].shape), resident(prep["b1"].shape),
            resident(prep["w2t"].shape), resident(prep["b2"].shape),
            resident(prep["w3t"].shape), resident(prep["b3"].shape),
        ],
        out_specs=pl.BlockSpec((TB, out_pad), lambda i: (i, 0)),
        compiler_params=pltpu.CompilerParams(
            dimension_semantics=("parallel",),
            vmem_limit_bytes=16 << 20,
        ),
    )(x_flat, y2, prep["w1t"], prep["b1"], prep["w2t"], prep["b2"],
      prep["w3t"], prep["b3"])

    out = out[:B, :out_features]
    return out.reshape((-1,) + tuple(output_size))


def init_decoder_params(key, in_features, out_features):
    """Canonical (PyTorch-layout, f32) parameters: W is (out, in)."""
    k1, k2, k3, k4, k5, k6 = jax.random.split(key, 6)
    scale = 0.02
    return {
        "w1": scale * jax.random.normal(k1, (HIDDEN0, in_features), jnp.float32),
        "b1": scale * jax.random.normal(k2, (HIDDEN0,), jnp.float32),
        "w2": scale * jax.random.normal(k3, (HIDDEN1, HIDDEN0), jnp.float32),
        "b2": scale * jax.random.normal(k4, (HIDDEN1,), jnp.float32),
        "w3": scale * jax.random.normal(k5, (out_features, HIDDEN1), jnp.float32),
        "b3": scale * jax.random.normal(k6, (out_features,), jnp.float32),
    }


def prepare_decoder_params(params, out_features):
    """One-time prep: transpose to (in, out), cast weights to bf16, pad the
    output layer to a multiple of 128 lanes. Biases stay f32."""
    out_pad = _round_up(out_features, 128)
    w3_pad = jnp.pad(params["w3"], ((0, out_pad - out_features), (0, 0)))
    b3_pad = jnp.pad(params["b3"], ((0, out_pad - out_features),))
    return {
        "w1t": params["w1"].T.astype(jnp.bfloat16),          # (in, 512)
        "b1": params["b1"].reshape(1, -1).astype(jnp.float32),
        "w2t": params["w2"].T.astype(jnp.bfloat16),          # (512, 1024)
        "b2": params["b2"].reshape(1, -1).astype(jnp.float32),
        "w3t": w3_pad.T.astype(jnp.bfloat16),                # (1024, out_pad)
        "b3": b3_pad.reshape(1, -1).astype(jnp.float32),
        "out_features": out_features,
    }


if __name__ == "__main__":
    key = jax.random.PRNGKey(0)
    kx, ky, kp = jax.random.split(key, 3)

    B = 2
    num_classes = 4
    in_features = 64           # capsule vector length
    output_size = (3, 64)      # decoded point cloud: 3 coords x 64 points
    out_features = output_size[0] * output_size[1]

    x = jax.random.normal(kx, (B, num_classes, in_features), jnp.float32)
    y = jax.random.randint(ky, (B,), 0, num_classes, jnp.int32)
    params = init_decoder_params(kp, in_features, out_features)
    prep = prepare_decoder_params(params, out_features)   # one-time weight prep

    out = decoder_forward(x, y, prep, output_size)
    out = jax.block_until_ready(out)

    # Sanity check against a pure-JAX f32 reference (bf16 weights -> loose tol).
    x_sel = x[jnp.arange(B), y, :]
    h1 = jnp.maximum(x_sel @ params["w1"].T + params["b1"], 0.0)
    h2 = jnp.maximum(h1 @ params["w2"].T + params["b2"], 0.0)
    ref = jax.nn.sigmoid(h2 @ params["w3"].T + params["b3"]).reshape((-1,) + output_size)
    assert out.shape == (B,) + output_size
    err = float(jnp.max(jnp.abs(out - ref)))
    assert jnp.allclose(out, ref, atol=1e-2, rtol=1e-2), f"max abs err {err}"

    print("KERNEL_OK")
</pallas_src>

<mosaic_0001>
module attributes {stable_mosaic.version = 11 : i64} {
  func.func @_decoder_kernel(%arg0: i32, %arg1: memref<8x256xf32, #tpu.memory_space<vmem>>, %arg2: memref<8x1xi32, #tpu.memory_space<vmem>>, %arg3: memref<64x512xbf16, #tpu.memory_space<vmem>>, %arg4: memref<1x512xf32, #tpu.memory_space<vmem>>, %arg5: memref<512x1024xbf16, #tpu.memory_space<vmem>>, %arg6: memref<1x1024xf32, #tpu.memory_space<vmem>>, %arg7: memref<1024x256xbf16, #tpu.memory_space<vmem>>, %arg8: memref<1x256xf32, #tpu.memory_space<vmem>>, %arg9: memref<8x256xf32, #tpu.memory_space<vmem>>) attributes {dimension_semantics = [#tpu.dimension_semantics<parallel>], iteration_bounds = array<i64: 1>, scalar_prefetch = 0 : i64, scratch_operands = 0 : i64, tpu.core_type = #tpu.core_type<tc>, window_params = [{transform_indices = @transform_0, window_bounds = array<i64: 8, 256>}, {transform_indices = @transform_1, window_bounds = array<i64: 8, 1>}, {pipeline_mode = #tpu.pipeline_mode<synchronous>, transform_indices = @transform_2, window_bounds = array<i64: 64, 512>}, {pipeline_mode = #tpu.pipeline_mode<synchronous>, transform_indices = @transform_3, window_bounds = array<i64: 1, 512>}, {pipeline_mode = #tpu.pipeline_mode<synchronous>, transform_indices = @transform_4, window_bounds = array<i64: 512, 1024>}, {pipeline_mode = #tpu.pipeline_mode<synchronous>, transform_indices = @transform_5, window_bounds = array<i64: 1, 1024>}, {pipeline_mode = #tpu.pipeline_mode<synchronous>, transform_indices = @transform_6, window_bounds = array<i64: 1024, 256>}, {pipeline_mode = #tpu.pipeline_mode<synchronous>, transform_indices = @transform_7, window_bounds = array<i64: 1, 256>}, {transform_indices = @transform_8, window_bounds = array<i64: 8, 256>}]} {
    %c0 = arith.constant 0 : index
    %c0_0 = arith.constant 0 : index
    %0 = vector.load %arg1[%c0, %c0_0] : memref<8x256xf32, #tpu.memory_space<vmem>>, vector<8x256xf32>
    %c0_1 = arith.constant 0 : index
    %c0_2 = arith.constant 0 : index
    %1 = vector.load %arg2[%c0_1, %c0_2] : memref<8x1xi32, #tpu.memory_space<vmem>>, vector<8x1xi32>
    %cst = arith.constant 0.000000e+00 : f32
    %2 = vector.broadcast %cst : f32 to vector<8x64xf32>
    %3 = vector.extract_strided_slice %0 {offsets = [0, 0], sizes = [8, 64], strides = [1, 1]} : vector<8x256xf32> to vector<8x64xf32>
    %c0_i32 = arith.constant 0 : i32
    %4 = vector.broadcast %c0_i32 : i32 to vector<8x1xi32>
    %5 = arith.cmpi eq, %1, %4 : vector<8x1xi32>
    %cst_3 = arith.constant 0.000000e+00 : f32
    %6 = vector.shape_cast %5 : vector<8x1xi1> to vector<8x1xi1>
    %7 = vector.broadcast %6 : vector<8x1xi1> to vector<8x64xi1>
    %8 = vector.broadcast %cst_3 : f32 to vector<8x64xf32>
    %9 = arith.select %7, %3, %8 : vector<8x64xi1>, vector<8x64xf32>
    %10 = arith.addf %2, %9 : vector<8x64xf32>
    %11 = vector.extract_strided_slice %0 {offsets = [0, 64], sizes = [8, 64], strides = [1, 1]} : vector<8x256xf32> to vector<8x64xf32>
    %c1_i32 = arith.constant 1 : i32
    %12 = vector.broadcast %c1_i32 : i32 to vector<8x1xi32>
    %13 = arith.cmpi eq, %1, %12 : vector<8x1xi32>
    %cst_4 = arith.constant 0.000000e+00 : f32
    %14 = vector.shape_cast %13 : vector<8x1xi1> to vector<8x1xi1>
    %15 = vector.broadcast %14 : vector<8x1xi1> to vector<8x64xi1>
    %16 = vector.broadcast %cst_4 : f32 to vector<8x64xf32>
    %17 = arith.select %15, %11, %16 : vector<8x64xi1>, vector<8x64xf32>
    %18 = arith.addf %10, %17 : vector<8x64xf32>
    %19 = vector.extract_strided_slice %0 {offsets = [0, 128], sizes = [8, 64], strides = [1, 1]} : vector<8x256xf32> to vector<8x64xf32>
    %c2_i32 = arith.constant 2 : i32
    %20 = vector.broadcast %c2_i32 : i32 to vector<8x1xi32>
    %21 = arith.cmpi eq, %1, %20 : vector<8x1xi32>
    %cst_5 = arith.constant 0.000000e+00 : f32
    %22 = vector.shape_cast %21 : vector<8x1xi1> to vector<8x1xi1>
    %23 = vector.broadcast %22 : vector<8x1xi1> to vector<8x64xi1>
    %24 = vector.broadcast %cst_5 : f32 to vector<8x64xf32>
    %25 = arith.select %23, %19, %24 : vector<8x64xi1>, vector<8x64xf32>
    %26 = arith.addf %18, %25 : vector<8x64xf32>
    %27 = vector.extract_strided_slice %0 {offsets = [0, 192], sizes = [8, 64], strides = [1, 1]} : vector<8x256xf32> to vector<8x64xf32>
    %c3_i32 = arith.constant 3 : i32
    %28 = vector.broadcast %c3_i32 : i32 to vector<8x1xi32>
    %29 = arith.cmpi eq, %1, %28 : vector<8x1xi32>
    %cst_6 = arith.constant 0.000000e+00 : f32
    %30 = vector.shape_cast %29 : vector<8x1xi1> to vector<8x1xi1>
    %31 = vector.broadcast %30 : vector<8x1xi1> to vector<8x64xi1>
    %32 = vector.broadcast %cst_6 : f32 to vector<8x64xf32>
    %33 = arith.select %31, %27, %32 : vector<8x64xi1>, vector<8x64xf32>
    %34 = arith.addf %26, %33 : vector<8x64xf32>
    %35 = arith.truncf %34 : vector<8x64xf32> to vector<8x64xbf16>
    %c0_7 = arith.constant 0 : index
    %c0_8 = arith.constant 0 : index
    %36 = vector.load %arg3[%c0_7, %c0_8] : memref<64x512xbf16, #tpu.memory_space<vmem>>, vector<64x512xbf16>
    %cst_9 = arith.constant dense<0.000000e+00> : vector<8x512xf32>
    %37 = tpu.matmul %35, %36, %cst_9 {dimension_numbers = #tpu.dot_dimension_numbers<[1], [0], [0], [1], [0, 0, 1, 1], [], []>} : vector<8x64xbf16>, vector<64x512xbf16>, vector<8x512xf32> -> vector<8x512xf32>
    %c0_10 = arith.constant 0 : index
    %c0_11 = arith.constant 0 : index
    %38 = vector.load %arg4[%c0_10, %c0_11] : memref<1x512xf32, #tpu.memory_space<vmem>>, vector<1x512xf32>
    %39 = vector.broadcast %38 : vector<1x512xf32> to vector<8x512xf32>
    %40 = arith.addf %37, %39 : vector<8x512xf32>
    %cst_12 = arith.constant 0.000000e+00 : f32
    %41 = vector.broadcast %cst_12 : f32 to vector<8x512xf32>
    %42 = arith.maximumf %40, %41 : vector<8x512xf32>
    %43 = arith.truncf %42 : vector<8x512xf32> to vector<8x512xbf16>
    %c0_13 = arith.constant 0 : index
    %c0_14 = arith.constant 0 : index
    %44 = vector.load %arg5[%c0_13, %c0_14] : memref<512x1024xbf16, #tpu.memory_space<vmem>>, vector<512x1024xbf16>
    %cst_15 = arith.constant dense<0.000000e+00> : vector<8x1024xf32>
    %45 = tpu.matmul %43, %44, %cst_15 {dimension_numbers = #tpu.dot_dimension_numbers<[1], [0], [0], [1], [0, 0, 1, 1], [], []>} : vector<8x512xbf16>, vector<512x1024xbf16>, vector<8x1024xf32> -> vector<8x1024xf32>
    %c0_16 = arith.constant 0 : index
    %c0_17 = arith.constant 0 : index
    %46 = vector.load %arg6[%c0_16, %c0_17] : memref<1x1024xf32, #tpu.memory_space<vmem>>, vector<1x1024xf32>
    %47 = vector.broadcast %46 : vector<1x1024xf32> to vector<8x1024xf32>
    %48 = arith.addf %45, %47 : vector<8x1024xf32>
    %cst_18 = arith.constant 0.000000e+00 : f32
    %49 = vector.broadcast %cst_18 : f32 to vector<8x1024xf32>
    %50 = arith.maximumf %48, %49 : vector<8x1024xf32>
    %51 = arith.truncf %50 : vector<8x1024xf32> to vector<8x1024xbf16>
    %c0_19 = arith.constant 0 : index
    %c0_20 = arith.constant 0 : index
    %52 = vector.load %arg7[%c0_19, %c0_20] : memref<1024x256xbf16, #tpu.memory_space<vmem>>, vector<1024x256xbf16>
    %cst_21 = arith.constant dense<0.000000e+00> : vector<8x256xf32>
    %53 = tpu.matmul %51, %52, %cst_21 {dimension_numbers = #tpu.dot_dimension_numbers<[1], [0], [0], [1], [0, 0, 1, 1], [], []>} : vector<8x1024xbf16>, vector<1024x256xbf16>, vector<8x256xf32> -> vector<8x256xf32>
    %c0_22 = arith.constant 0 : index
    %c0_23 = arith.constant 0 : index
    %54 = vector.load %arg8[%c0_22, %c0_23] : memref<1x256xf32, #tpu.memory_space<vmem>>, vector<1x256xf32>
    %55 = vector.broadcast %54 : vector<1x256xf32> to vector<8x256xf32>
    %56 = arith.addf %53, %55 : vector<8x256xf32>
    %57 = arith.negf %56 : vector<8x256xf32>
    %58 = math.exp %57 : vector<8x256xf32>
    %cst_24 = arith.constant 1.000000e+00 : f32
    %59 = vector.broadcast %cst_24 : f32 to vector<8x256xf32>
    %60 = arith.addf %59, %58 : vector<8x256xf32>
    %61 = arith.divf %59, %60 : vector<8x256xf32>
    %c0_25 = arith.constant 0 : index
    %c0_26 = arith.constant 0 : index
    %62 = vector.load %arg9[%c0_25, %c0_26] : memref<8x256xf32, #tpu.memory_space<vmem>>, vector<8x256xf32>
    tpu.vector_store %arg9[%c0_25, %c0_26], %61 {strides = array<i32>} : memref<8x256xf32, #tpu.memory_space<vmem>>, vector<8x256xf32>,
    return
  }
  func.func @transform_0(%arg0: i32) -> (i32, i32) {
    %c0_i32 = arith.constant 0 : i32
    %c0_i32_0 = arith.constant 0 : i32
    return %arg0, %c0_i32 : i32, i32
  }
  func.func @transform_1(%arg0: i32) -> (i32, i32) {
    %c0_i32 = arith.constant 0 : i32
    %c0_i32_0 = arith.constant 0 : i32
    return %arg0, %c0_i32 : i32, i32
  }
  func.func @transform_2(%arg0: i32) -> (i32, i32) {
    %c0_i32 = arith.constant 0 : i32
    %c0_i32_0 = arith.constant 0 : i32
    %c0_i32_1 = arith.constant 0 : i32
    return %c0_i32, %c0_i32_0 : i32, i32
  }
  func.func @transform_3(%arg0: i32) -> (i32, i32) {
    %c0_i32 = arith.constant 0 : i32
    %c0_i32_0 = arith.constant 0 : i32
    %c0_i32_1 = arith.constant 0 : i32
    return %c0_i32, %c0_i32_0 : i32, i32
  }
  func.func @transform_4(%arg0: i32) -> (i32, i32) {
    %c0_i32 = arith.constant 0 : i32
    %c0_i32_0 = arith.constant 0 : i32
    %c0_i32_1 = arith.constant 0 : i32
    return %c0_i32, %c0_i32_0 : i32, i32
  }
  func.func @transform_5(%arg0: i32) -> (i32, i32) {
    %c0_i32 = arith.constant 0 : i32
    %c0_i32_0 = arith.constant 0 : i32
    %c0_i32_1 = arith.constant 0 : i32
    return %c0_i32, %c0_i32_0 : i32, i32
  }
  func.func @transform_6(%arg0: i32) -> (i32, i32) {
    %c0_i32 = arith.constant 0 : i32
    %c0_i32_0 = arith.constant 0 : i32
    %c0_i32_1 = arith.constant 0 : i32
    return %c0_i32, %c0_i32_0 : i32, i32
  }
  func.func @transform_7(%arg0: i32) -> (i32, i32) {
    %c0_i32 = arith.constant 0 : i32
    %c0_i32_0 = arith.constant 0 : i32
    %c0_i32_1 = arith.constant 0 : i32
    return %c0_i32, %c0_i32_0 : i32, i32
  }
  func.func @transform_8(%arg0: i32) -> (i32, i32) {
    %c0_i32 = arith.constant 0 : i32
    %c0_i32_0 = arith.constant 0 : i32
    return %arg0, %c0_i32 : i32, i32
  }
}

</mosaic_0001>

<llo_original>
// kernel: tpu_custom_call.1
$region0: #{tpu_custom_call.1}
  #allocation0 [shape = 'u32[]', space=smem, size = 0x4, offset = 0x4, fixed_abs, tag = 'smem constant byte address 0x4 - core index']
  #allocation1 [shape = 'u32[144,128]{1,0:T(1,128)}', space=vmem, size = 0x12000, scoped, tag = 'internal scratch']
  %s0 = inlined_call_operand.hbm [shape: f32[8,256], index: 0, kind: input, shape index: {}]
  %s1 = inlined_call_operand.vmem [shape: s32[8,1], index: 1, kind: input, shape index: {}]
  %s2 = inlined_call_operand.hbm [shape: bf16[64,512], index: 2, kind: input, shape index: {}]
  %s3 = inlined_call_operand.vmem [shape: f32[1,512], index: 3, kind: input, shape index: {}]
  %s4 = inlined_call_operand.hbm [shape: bf16[512,1024], index: 4, kind: input, shape index: {}]
  %s5 = inlined_call_operand.vmem [shape: f32[1,1024], index: 5, kind: input, shape index: {}]
  %s6 = inlined_call_operand.hbm [shape: bf16[1024,256], index: 6, kind: input, shape index: {}]
  %s7 = inlined_call_operand.vmem [shape: f32[1,256], index: 7, kind: input, shape index: {}]
  %s8 = inlined_call_operand.hbm [shape: f32[8,256], index: 8, kind: output, shape index: {}]
  %s9 = sld [smem:[#allocation0]]
  $region58: #{tpu_custom_call.1} parent=0
    _
  %s11 = ssub.s32 1, %s9
  %s12 = scalar_select 0, %s11, %s9
  $region1: #{tpu_custom_call.1} parent=0
    #allocation2 [shape = 'u8[8192]{0}', space=vmem, size = 0x2000, scoped, tag = 'input window, operand 0, single buffered']
    #allocation3 [shape = 's32[1]{0}', space=sflag, size = 0x4, scoped, tag = 'scoped memory for tpu_custom_call.1']
    #allocation4 [shape = 's32[1]{0}', space=sflag, size = 0x4, scoped, tag = 'scoped memory for tpu_custom_call.1']
    #allocation5 [shape = 'u8[65536]{0}', space=vmem, size = 0x10000, scoped, tag = 'input window, operand 2, single buffered']
    #allocation6 [shape = 's32[1]{0}', space=sflag, size = 0x4, scoped, tag = 'scoped memory for tpu_custom_call.1']
    #allocation7 [shape = 'u8[1048576]{0}', space=vmem, size = 0x100000, scoped, tag = 'input window, operand 4, single buffered']
    #allocation8 [shape = 'u8[524288]{0}', space=vmem, size = 0x80000, scoped, tag = 'input window, operand 6, single buffered']
    #allocation9 [shape = 's32[1]{0}', space=sflag, size = 0x4, scoped, tag = 'scoped memory for tpu_custom_call.1']
    #allocation10 [shape = 'u8[8192]{0}', space=vmem, size = 0x2000, scoped, tag = 'output window, operand 0, single buffered']
    %13 = vsyncpa [#allocation3], 0
    %14 = vsyncpa [#allocation6], 0
    %15 = vsyncpa [#allocation9], 0
    %16 = vsyncpa [#allocation4], 0
    // Predicated region
    $region2: #{tpu_custom_call.1} parent=1 // pred_check
      _
    $region3: #{tpu_custom_call.1} parent=1 // pred_check_branch
      %18 = sbr.rel (0) target = $region5
    $region4: #{tpu_custom_call.1} parent=1 // pred_region
      %s20 = ssub.s32 256, 256
      %21 = vsyncadd [#allocation3], %s20
      %s23 = sshll.u32 [#allocation2], 4
      %s24 = int_to_ptr.vmem [resolvable:$true] %s23
      %26 = dma.hbm_to_vmem [thread:$0]  %s0, 256, %s24, [#allocation3]
    $region5: #{tpu_custom_call.1} parent=1 // pred_fallthru
      _
    // Predicated region
    $region6: #{tpu_custom_call.1} parent=1 // pred_check
      _
    $region7: #{tpu_custom_call.1} parent=1 // pred_check_branch
      %28 = sbr.rel (0) target = $region9
    $region8: #{tpu_custom_call.1} parent=1 // pred_region
      _
    $region9: #{tpu_custom_call.1} parent=1 // pred_fallthru
      _
    // Predicated region
    $region10: #{tpu_custom_call.1} parent=1 // pred_check
      _
    $region11: #{tpu_custom_call.1} parent=1 // pred_check_branch
      %30 = sbr.rel (0) target = $region13
    $region12: #{tpu_custom_call.1} parent=1 // pred_region
      %s32 = ssub.s32 2048, 2048
      %33 = vsyncadd [#allocation6], %s32
      %s34 = sshll.u32 [#allocation5], 4
      %s35 = int_to_ptr.vmem [resolvable:$true] %s34
      %40 = dma.hbm_to_vmem [thread:$0]  %s2, 2048, %s35, [#allocation6], 256, 256, 16
    $region13: #{tpu_custom_call.1} parent=1 // pred_fallthru
      _
    // Predicated region
    $region14: #{tpu_custom_call.1} parent=1 // pred_check
      _
    $region15: #{tpu_custom_call.1} parent=1 // pred_check_branch
      %42 = sbr.rel (0) target = $region17
    $region16: #{tpu_custom_call.1} parent=1 // pred_region
      _
    $region17: #{tpu_custom_call.1} parent=1 // pred_fallthru
      _
    // Predicated region
    $region18: #{tpu_custom_call.1} parent=1 // pred_check
      _
    $region19: #{tpu_custom_call.1} parent=1 // pred_check_branch
      %44 = sbr.rel (0) target = $region21
    $region20: #{tpu_custom_call.1} parent=1 // pred_region
      %s46 = ssub.s32 32768, 32768
      %47 = vsyncadd [#allocation6], %s46
      %s48 = sshll.u32 [#allocation7], 4
      %s49 = int_to_ptr.vmem [resolvable:$true] %s48
      %54 = dma.hbm_to_vmem [thread:$0]  %s4, 32768, %s49, [#allocation6], 512, 512, 32
    $region21: #{tpu_custom_call.1} parent=1 // pred_fallthru
      _
    // Predicated region
    $region22: #{tpu_custom_call.1} parent=1 // pred_check
      _
    $region23: #{tpu_custom_call.1} parent=1 // pred_check_branch
      %56 = sbr.rel (0) target = $region25
    $region24: #{tpu_custom_call.1} parent=1 // pred_region
      _
    $region25: #{tpu_custom_call.1} parent=1 // pred_fallthru
      _
    // Predicated region
    $region26: #{tpu_custom_call.1} parent=1 // pred_check
      _
    $region27: #{tpu_custom_call.1} parent=1 // pred_check_branch
      %58 = sbr.rel (0) target = $region29
    $region28: #{tpu_custom_call.1} parent=1 // pred_region
      %s60 = ssub.s32 16384, 16384
      %61 = vsyncadd [#allocation9], %s60
      %s62 = sshll.u32 [#allocation8], 4
      %s63 = int_to_ptr.vmem [resolvable:$true] %s62
      %68 = dma.hbm_to_vmem [thread:$0]  %s6, 16384, %s63, [#allocation9], 128, 128, 8
    $region29: #{tpu_custom_call.1} parent=1 // pred_fallthru
      _
    // Predicated region
    $region30: #{tpu_custom_call.1} parent=1 // pred_check
      _
    $region31: #{tpu_custom_call.1} parent=1 // pred_check_branch
      %70 = sbr.rel (0) target = $region33
    $region32: #{tpu_custom_call.1} parent=1 // pred_region
      _
    $region33: #{tpu_custom_call.1} parent=1 // pred_fallthru
      _
    // Predicated region
    $region34: #{tpu_custom_call.1} parent=1 // pred_check
      _
    $region35: #{tpu_custom_call.1} parent=1 // pred_check_branch
      %72 = sbr.rel (0) target = $region37
    $region36: #{tpu_custom_call.1} parent=1 // pred_region
      %73 = dma.done [#allocation3], 256
    $region37: #{tpu_custom_call.1} parent=1 // pred_fallthru
      _
    // Predicated region
    $region38: #{tpu_custom_call.1} parent=1 // pred_check
      _
    $region39: #{tpu_custom_call.1} parent=1 // pred_check_branch
      %75 = sbr.rel (0) target = $region41
    $region40: #{tpu_custom_call.1} parent=1 // pred_region
      %76 = dma.done [#allocation6], 2048
    $region41: #{tpu_custom_call.1} parent=1 // pred_fallthru
      _
    // Predicated region
    $region42: #{tpu_custom_call.1} parent=1 // pred_check
      _
    $region43: #{tpu_custom_call.1} parent=1 // pred_check_branch
      %78 = sbr.rel (0) target = $region45
    $region44: #{tpu_custom_call.1} parent=1 // pred_region
      %79 = dma.done [#allocation6], 32768
    $region45: #{tpu_custom_call.1} parent=1 // pred_fallthru
      _
    // Predicated region
    $region46: #{tpu_custom_call.1} parent=1 // pred_check
      _
    $region47: #{tpu_custom_call.1} parent=1 // pred_check_branch
      %81 = sbr.rel (0) target = $region49
    $region48: #{tpu_custom_call.1} parent=1 // pred_region
      %82 = dma.done [#allocation9], 16384
    $region49: #{tpu_custom_call.1} parent=1 // pred_fallthru
      _
    %v84 = vld [vmem:[#allocation2] sm:$0xff]
    %v85 = vld [vmem:[#allocation2 + $0x8] sm:$0xff]
    %v86 = vld [vmem:[%s1] sm:$0xff]
    %vm87 = vcmp.eq.s32.totalorder %v86, 0
    %v88 = vsel %vm87, 1, 0
    %89 = vset.pattern.permute.xlu0 0
    %90 = vperm.xlu0 %89, %v88
    %v91 = vpop.permute.xlu0 %90
    %vm92 = vcmp.eq.s32.totalorder %v91, 1
    %v93 = vsel %vm92, %v84, 0.0
    %v94 = vadd.f32 %v93, 0.0
    %vm95 = vcmp.eq.s32.totalorder %v86, 1
    %v96 = vsel %vm95, 1, 0
    %97 = vset.pattern.permute.xlu0 0
    %98 = vperm.xlu0 %97, %v96
    %v99 = vpop.permute.xlu0 %98
    %vm100 = vcmp.eq.s32.totalorder %v99, 1
    %v101 = vsel %vm100, %v84, 0.0
    %103 = vrot.lane.b32.xlu0 %v101, 64
    %v104 = vpop.permute.xlu0 %103
    %v106 = vadd.f32 %v94, %v104
    %vm107 = vcmp.eq.s32.totalorder %v86, 2
    %v108 = vsel %vm107, 1, 0
    %109 = vset.pattern.permute.xlu0 0
    %110 = vperm.xlu0 %109, %v108
    %v111 = vpop.permute.xlu0 %110
    %vm112 = vcmp.eq.s32.totalorder %v111, 1
    %v113 = vsel %vm112, %v85, 0.0
    %v114 = vadd.f32 %v106, %v113
    %vm115 = vcmp.eq.s32.totalorder %v86, 3
    %v116 = vsel %vm115, 1, 0
    %117 = vset.pattern.permute.xlu0 0
    %118 = vperm.xlu0 %117, %v116
    %v119 = vpop.permute.xlu0 %118
    %vm120 = vcmp.eq.s32.totalorder %v119, 1
    %v121 = vsel %vm120, %v85, 0.0
    %123 = vrot.lane.b32.xlu0 %v121, 64
    %v124 = vpop.permute.xlu0 %123
    %v126 = vadd.f32 %v114, %v124
    %v127 = vpack.c.bf16 %v126, %v126
    %v128 = vld [vmem:[#allocation5] sm:$0xff]
    %v129 = vld [vmem:[#allocation5 + $0x8] sm:$0xff]
    %v130 = vld [vmem:[#allocation5 + $0x10] sm:$0xff]
    %v131 = vld [vmem:[#allocation5 + $0x18] sm:$0xff]
    %v132 = vld [vmem:[#allocation5 + $0x20] sm:$0xff]
    %v133 = vld [vmem:[#allocation5 + $0x28] sm:$0xff]
    %v134 = vld [vmem:[#allocation5 + $0x30] sm:$0xff]
    %v135 = vld [vmem:[#allocation5 + $0x38] sm:$0xff]
    %v136 = vld [vmem:[#allocation5 + $0x40] sm:$0xff]
    %v137 = vld [vmem:[#allocation5 + $0x48] sm:$0xff]
    %v138 = vld [vmem:[#allocation5 + $0x50] sm:$0xff]
    %v139 = vld [vmem:[#allocation5 + $0x58] sm:$0xff]
    %v140 = vld [vmem:[#allocation5 + $0x60] sm:$0xff]
    %v141 = vld [vmem:[#allocation5 + $0x68] sm:$0xff]
    %v142 = vld [vmem:[#allocation5 + $0x70] sm:$0xff]
    %v143 = vld [vmem:[#allocation5 + $0x78] sm:$0xff]
    %v144 = vld [vmem:[%s3] sm:$0xf]
    %v146 = vlaneseq
    %v147 = vshrl.u32 %v146, 7
    %v148 = vsub.s32 0, %v147
    %v149 = vrot.slane %v144, %v148
    %v150 = vlaneseq
    %v151 = vshrl.u32 %v150, 7
    %v152 = vsub.s32 1, %v151
    %v153 = vrot.slane %v144, %v152
    %v154 = vlaneseq
    %v155 = vshrl.u32 %v154, 7
    %v156 = vsub.s32 2, %v155
    %v157 = vrot.slane %v144, %v156
    %v158 = vlaneseq
    %v159 = vshrl.u32 %v158, 7
    %v160 = vsub.s32 3, %v159
    %v161 = vrot.slane %v144, %v160
    %v182 = vunpack.c.l.b16 %v128
    %v183 = vunpack.c.h.b16 %v128
    %v184 = vunpack.c.l.b16 %v129
    %v185 = vunpack.c.h.b16 %v129
    %v186 = vunpack.c.l.b16 %v130
    %v187 = vunpack.c.h.b16 %v130
    %v188 = vunpack.c.l.b16 %v131
    %v189 = vunpack.c.h.b16 %v131
    %v190 = vunpack.c.l.b16 %v132
    %v191 = vunpack.c.h.b16 %v132
    %v192 = vunpack.c.l.b16 %v133
    %v193 = vunpack.c.h.b16 %v133
    %v194 = vunpack.c.l.b16 %v134
    %v195 = vunpack.c.h.b16 %v134
    %v196 = vunpack.c.l.b16 %v135
    %v197 = vunpack.c.h.b16 %v135
    %v198 = vunpack.c.l.b16 %v136
    %v199 = vunpack.c.h.b16 %v136
    %v200 = vunpack.c.l.b16 %v137
    %v201 = vunpack.c.h.b16 %v137
    %v202 = vunpack.c.l.b16 %v138
    %v203 = vunpack.c.h.b16 %v138
    %v204 = vunpack.c.l.b16 %v139
    %v205 = vunpack.c.h.b16 %v139
    %v206 = vunpack.c.l.b16 %v140
    %v207 = vunpack.c.h.b16 %v140
    %v208 = vunpack.c.l.b16 %v141
    %v209 = vunpack.c.h.b16 %v141
    %v210 = vunpack.c.l.b16 %v142
    %v211 = vunpack.c.h.b16 %v142
    %v212 = vunpack.c.l.b16 %v143
    %v213 = vunpack.c.h.b16 %v143
    %v214 = vpack.c.b16 %v186, %v182
    %v215 = vpack.c.b16 %v187, %v183
    %v216 = vpack.c.b16 %v188, %v184
    %v217 = vpack.c.b16 %v189, %v185
    %v218 = vpack.c.b16 %v194, %v190
    %v219 = vpack.c.b16 %v195, %v191
    %v220 = vpack.c.b16 %v196, %v192
    %v221 = vpack.c.b16 %v197, %v193
    %v222 = vpack.c.b16 %v202, %v198
    %v223 = vpack.c.b16 %v203, %v199
    %v224 = vpack.c.b16 %v204, %v200
    %v225 = vpack.c.b16 %v205, %v201
    %v226 = vpack.c.b16 %v210, %v206
    %v227 = vpack.c.b16 %v211, %v207
    %v228 = vpack.c.b16 %v212, %v208
    %v229 = vpack.c.b16 %v213, %v209
    %vm246 = vcmask 523264
    %v248 = vsel %vm246, %v127, 0
    %250 = vmatprep.subr.bf16.mxu0 %v215
    %251 = vmatpush1.bf16.msra.mxu0 %v214
    %252 = vmatprep.subr.bf16.mxu0 %v219
    %253 = vmatpush1.bf16.msra.mxu0 %v218
    %254 = vmatprep.subr.bf16.mxu0 %v223
    %255 = vmatpush1.bf16.msra.mxu0 %v222
    %256 = vmatprep.subr.bf16.mxu0 %v227
    %257 = vmatpush1.bf16.msra.mxu0 %v226
    %258 = vmatprep.subr.bf16.mxu0 0
    %259 = vmatpush1.bf16.msra.mxu0 0
    %260 = vmatprep.subr.bf16.mxu0 0
    %261 = vmatpush1.bf16.msra.mxu0 0
    %262 = vmatprep.subr.bf16.mxu0 0
    %263 = vmatpush1.bf16.msra.mxu0 0
    %264 = vmatprep.subr.bf16.mxu0 0
    %265 = vmatpush1.bf16.msra.mxu0 0
    %266 = vmatprep.subr.bf16.mxu0 0
    %267 = vmatpush1.bf16.msra.mxu0 0
    %268 = vmatprep.subr.bf16.mxu0 0
    %269 = vmatpush1.bf16.msra.mxu0 0
    %270 = vmatprep.subr.bf16.mxu0 0
    %271 = vmatpush1.bf16.msra.mxu0 0
    %272 = vmatprep.subr.bf16.mxu0 0
    %273 = vmatpush1.bf16.msra.mxu0 0
    %274 = vmatprep.subr.bf16.mxu0 0
    %275 = vmatpush1.bf16.msra.mxu0 0
    %276 = vmatprep.subr.bf16.mxu0 0
    %277 = vmatpush1.bf16.msra.mxu0 0
    %278 = vmatprep.subr.bf16.mxu0 0
    %279 = vmatpush1.bf16.msra.mxu0 0
    %280 = vmatprep.subr.bf16.mxu0 0
    %281 = vmatpush1.bf16.msra.mxu0 0
    %282 = vmatprep.mubr.bf16.mxu0 0
    %283 = vmatmul.mubr.bf16.gmra.mrb[0].mxu0 %v248
    %v284 = vpop.f32.mrb[0].mxu0
    %v285 = vadd.f32 %v149, %v284
    %v286 = vpop.f32.mrb[0].mxu0
    %v287 = vadd.f32 %v153, %v286
    %v288 = vpop.f32.mrb[0].mxu0
    %v289 = vpop.f32.mrb[0].mxu0
    %290 = vdwg.mxu0
    %291 = vmatprep.subr.bf16.mxu0 %v217
    %292 = vmatpush1.bf16.msra.mxu0 %v216
    %293 = vmatprep.subr.bf16.mxu0 %v221
    %294 = vmatpush1.bf16.msra.mxu0 %v220
    %295 = vmatprep.subr.bf16.mxu0 %v225
    %296 = vmatpush1.bf16.msra.mxu0 %v224
    %297 = vmatprep.subr.bf16.mxu0 %v229
    %298 = vmatpush1.bf16.msra.mxu0 %v228
    %299 = vmatprep.subr.bf16.mxu0 0
    %300 = vmatpush1.bf16.msra.mxu0 0
    %301 = vmatprep.subr.bf16.mxu0 0
    %302 = vmatpush1.bf16.msra.mxu0 0
    %303 = vmatprep.subr.bf16.mxu0 0
    %304 = vmatpush1.bf16.msra.mxu0 0
    %305 = vmatprep.subr.bf16.mxu0 0
    %306 = vmatpush1.bf16.msra.mxu0 0
    %307 = vmatprep.subr.bf16.mxu0 0
    %308 = vmatpush1.bf16.msra.mxu0 0
    %309 = vmatprep.subr.bf16.mxu0 0
    %310 = vmatpush1.bf16.msra.mxu0 0
    %311 = vmatprep.subr.bf16.mxu0 0
    %312 = vmatpush1.bf16.msra.mxu0 0
    %313 = vmatprep.subr.bf16.mxu0 0
    %314 = vmatpush1.bf16.msra.mxu0 0
    %315 = vmatprep.subr.bf16.mxu0 0
    %316 = vmatpush1.bf16.msra.mxu0 0
    %317 = vmatprep.subr.bf16.mxu0 0
    %318 = vmatpush1.bf16.msra.mxu0 0
    %319 = vmatprep.subr.bf16.mxu0 0
    %320 = vmatpush1.bf16.msra.mxu0 0
    %321 = vmatprep.subr.bf16.mxu0 0
    %322 = vmatpush1.bf16.msra.mxu0 0
    %323 = vmatprep.mubr.bf16.mxu0 0
    %324 = vmatmul.mubr.bf16.gmra.mrb[0].mxu0 %v248
    %v325 = vpop.f32.mrb[0].mxu0
    %v326 = vadd.f32 %v157, %v325
    %v327 = vpop.f32.mrb[0].mxu0
    %v328 = vadd.f32 %v161, %v327
    %v329 = vpop.f32.mrb[0].mxu0
    %v330 = vpop.f32.mrb[0].mxu0
    %331 = vdwg.mxu0
    %v332 = vmax.f32 %v285, 0.0
    %v333 = vmax.f32 %v287, 0.0
    %v334 = vmax.f32 %v326, 0.0
    %v335 = vmax.f32 %v328, 0.0
    %v336 = vpack.c.bf16 %v332, %v332
    %v337 = vpack.c.bf16 %v333, %v333
    %v338 = vpack.c.bf16 %v334, %v334
    %v339 = vpack.c.bf16 %v335, %v335
    %v340 = vld [vmem:[#allocation7] sm:$0xff]
    %v341 = vld [vmem:[#allocation7 + $0x8] sm:$0xff]
    %v342 = vld [vmem:[#allocation7 + $0x10] sm:$0xff]
    %v343 = vld [vmem:[#allocation7 + $0x18] sm:$0xff]
    %v344 = vld [vmem:[#allocation7 + $0x20] sm:$0xff]
    %v345 = vld [vmem:[#allocation7 + $0x28] sm:$0xff]
    %v346 = vld [vmem:[#allocation7 + $0x30] sm:$0xff]
    %v347 = vld [vmem:[#allocation7 + $0x38] sm:$0xff]
    %v348 = vld [vmem:[#allocation7 + $0x40] sm:$0xff]
    %v349 = vld [vmem:[#allocation7 + $0x48] sm:$0xff]
    %v350 = vld [vmem:[#allocation7 + $0x50] sm:$0xff]
    %v351 = vld [vmem:[#allocation7 + $0x58] sm:$0xff]
    %v352 = vld [vmem:[#allocation7 + $0x60] sm:$0xff]
    %v353 = vld [vmem:[#allocation7 + $0x68] sm:$0xff]
    %v354 = vld [vmem:[#allocation7 + $0x70] sm:$0xff]
    %v355 = vld [vmem:[#allocation7 + $0x78] sm:$0xff]
    %v356 = vld [vmem:[#allocation7 + $0x80] sm:$0xff]
    %v357 = vld [vmem:[#allocation7 + $0x88] sm:$0xff]
    %v358 = vld [vmem:[#allocation7 + $0x90] sm:$0xff]
    %v359 = vld [vmem:[#allocation7 + $0x98] sm:$0xff]
    %v360 = vld [vmem:[#allocation7 + $0xa0] sm:$0xff]
    %v361 = vld [vmem:[#allocation7 + $0xa8] sm:$0xff]
    %v362 = vld [vmem:[#allocation7 + $0xb0] sm:$0xff]
    %v363 = vld [vmem:[#allocation7 + $0xb8] sm:$0xff]
    %v364 = vld [vmem:[#allocation7 + $0xc0] sm:$0xff]
    %v365 = vld [vmem:[#allocation7 + $0xc8] sm:$0xff]
    %v366 = vld [vmem:[#allocation7 + $0xd0] sm:$0xff]
    %v367 = vld [vmem:[#allocation7 + $0xd8] sm:$0xff]
    %v368 = vld [vmem:[#allocation7 + $0xe0] sm:$0xff]
    %v369 = vld [vmem:[#allocation7 + $0xe8] sm:$0xff]
    %v370 = vld [vmem:[#allocation7 + $0xf0] sm:$0xff]
    %v371 = vld [vmem:[#allocation7 + $0xf8] sm:$0xff]
    %v372 = vld [vmem:[#allocation7 + $0x100] sm:$0xff]
    %v373 = vld [vmem:[#allocation7 + $0x108] sm:$0xff]
    %v374 = vld [vmem:[#allocation7 + $0x110] sm:$0xff]
    %v375 = vld [vmem:[#allocation7 + $0x118] sm:$0xff]
    %v376 = vld [vmem:[#allocation7 + $0x120] sm:$0xff]
    %v377 = vld [vmem:[#allocation7 + $0x128] sm:$0xff]
    %v378 = vld [vmem:[#allocation7 + $0x130] sm:$0xff]
    %v379 = vld [vmem:[#allocation7 + $0x138] sm:$0xff]
    %v380 = vld [vmem:[#allocation7 + $0x140] sm:$0xff]
    %v381 = vld [vmem:[#allocation7 + $0x148] sm:$0xff]
    %v382 = vld [vmem:[#allocation7 + $0x150] sm:$0xff]
    %v383 = vld [vmem:[#allocation7 + $0x158] sm:$0xff]
    %v384 = vld [vmem:[#allocation7 + $0x160] sm:$0xff]
    %v385 = vld [vmem:[#allocation7 + $0x168] sm:$0xff]
    %v386 = vld [vmem:[#allocation7 + $0x170] sm:$0xff]
    %v387 = vld [vmem:[#allocation7 + $0x178] sm:$0xff]
    %v388 = vld [vmem:[#allocation7 + $0x180] sm:$0xff]
    %v389 = vld [vmem:[#allocation7 + $0x188] sm:$0xff]
    %v390 = vld [vmem:[#allocation7 + $0x190] sm:$0xff]
    %v391 = vld [vmem:[#allocation7 + $0x198] sm:$0xff]
    %v392 = vld [vmem:[#allocation7 + $0x1a0] sm:$0xff]
    %v393 = vld [vmem:[#allocation7 + $0x1a8] sm:$0xff]
    %v394 = vld [vmem:[#allocation7 + $0x1b0] sm:$0xff]
    %v395 = vld [vmem:[#allocation7 + $0x1b8] sm:$0xff]
    %v396 = vld [vmem:[#allocation7 + $0x1c0] sm:$0xff]
    %v397 = vld [vmem:[#allocation7 + $0x1c8] sm:$0xff]
    %v398 = vld [vmem:[#allocation7 + $0x1d0] sm:$0xff]
    %v399 = vld [vmem:[#allocation7 + $0x1d8] sm:$0xff]
    %v400 = vld [vmem:[#allocation7 + $0x1e0] sm:$0xff]
    %v401 = vld [vmem:[#allocation7 + $0x1e8] sm:$0xff]
    %v402 = vld [vmem:[#allocation7 + $0x1f0] sm:$0xff]
    %v403 = vld [vmem:[#allocation7 + $0x1f8] sm:$0xff]
    %v404 = vld [vmem:[#allocation7 + $0x200] sm:$0xff]
    %v405 = vld [vmem:[#allocation7 + $0x208] sm:$0xff]
    %v406 = vld [vmem:[#allocation7 + $0x210] sm:$0xff]
    %v407 = vld [vmem:[#allocation7 + $0x218] sm:$0xff]
    %v408 = vld [vmem:[#allocation7 + $0x220] sm:$0xff]
    %v409 = vld [vmem:[#allocation7 + $0x228] sm:$0xff]
    %v410 = vld [vmem:[#allocation7 + $0x230] sm:$0xff]
    %v411 = vld [vmem:[#allocation7 + $0x238] sm:$0xff]
    %v412 = vld [vmem:[#allocation7 + $0x240] sm:$0xff]
    %v413 = vld [vmem:[#allocation7 + $0x248] sm:$0xff]
    %v414 = vld [vmem:[#allocation7 + $0x250] sm:$0xff]
    %v415 = vld [vmem:[#allocation7 + $0x258] sm:$0xff]
    %v416 = vld [vmem:[#allocation7 + $0x260] sm:$0xff]
    %v417 = vld [vmem:[#allocation7 + $0x268] sm:$0xff]
    %v418 = vld [vmem:[#allocation7 + $0x270] sm:$0xff]
    %v419 = vld [vmem:[#allocation7 + $0x278] sm:$0xff]
    %v420 = vld [vmem:[#allocation7 + $0x280] sm:$0xff]
    %v421 = vld [vmem:[#allocation7 + $0x288] sm:$0xff]
    %v422 = vld [vmem:[#allocation7 + $0x290] sm:$0xff]
    %v423 = vld [vmem:[#allocation7 + $0x298] sm:$0xff]
    %v424 = vld [vmem:[#allocation7 + $0x2a0] sm:$0xff]
    %v425 = vld [vmem:[#allocation7 + $0x2a8] sm:$0xff]
    %v426 = vld [vmem:[#allocation7 + $0x2b0] sm:$0xff]
    %v427 = vld [vmem:[#allocation7 + $0x2b8] sm:$0xff]
    %v428 = vld [vmem:[#allocation7 + $0x2c0] sm:$0xff]
    %v429 = vld [vmem:[#allocation7 + $0x2c8] sm:$0xff]
    %v430 = vld [vmem:[#allocation7 + $0x2d0] sm:$0xff]
    %v431 = vld [vmem:[#allocation7 + $0x2d8] sm:$0xff]
    %v432 = vld [vmem:[#allocation7 + $0x2e0] sm:$0xff]
    %v433 = vld [vmem:[#allocation7 + $0x2e8] sm:$0xff]
    %v434 = vld [vmem:[#allocation7 + $0x2f0] sm:$0xff]
    %v435 = vld [vmem:[#allocation7 + $0x2f8] sm:$0xff]
    %v436 = vld [vmem:[#allocation7 + $0x300] sm:$0xff]
    %v437 = vld [vmem:[#allocation7 + $0x308] sm:$0xff]
    %v438 = vld [vmem:[#allocation7 + $0x310] sm:$0xff]
    %v439 = vld [vmem:[#allocation7 + $0x318] sm:$0xff]
    %v440 = vld [vmem:[#allocation7 + $0x320] sm:$0xff]
    %v441 = vld [vmem:[#allocation7 + $0x328] sm:$0xff]
    %v442 = vld [vmem:[#allocation7 + $0x330] sm:$0xff]
    %v443 = vld [vmem:[#allocation7 + $0x338] sm:$0xff]
    %v444 = vld [vmem:[#allocation7 + $0x340] sm:$0xff]
    %v445 = vld [vmem:[#allocation7 + $0x348] sm:$0xff]
    %v446 = vld [vmem:[#allocation7 + $0x350] sm:$0xff]
    %v447 = vld [vmem:[#allocation7 + $0x358] sm:$0xff]
    %v448 = vld [vmem:[#allocation7 + $0x360] sm:$0xff]
    %v449 = vld [vmem:[#allocation7 + $0x368] sm:$0xff]
    %v450 = vld [vmem:[#allocation7 + $0x370] sm:$0xff]
    %v451 = vld [vmem:[#allocation7 + $0x378] sm:$0xff]
    %v452 = vld [vmem:[#allocation7 + $0x380] sm:$0xff]
    %v453 = vld [vmem:[#allocation7 + $0x388] sm:$0xff]
    %v454 = vld [vmem:[#allocation7 + $0x390] sm:$0xff]
    %v455 = vld [vmem:[#allocation7 + $0x398] sm:$0xff]
    %v456 = vld [vmem:[#allocation7 + $0x3a0] sm:$0xff]
    %v457 = vld [vmem:[#allocation7 + $0x3a8] sm:$0xff]
    %v458 = vld [vmem:[#allocation7 + $0x3b0] sm:$0xff]
    %v459 = vld [vmem:[#allocation7 + $0x3b8] sm:$0xff]
    %v460 = vld [vmem:[#allocation7 + $0x3c0] sm:$0xff]
    %v461 = vld [vmem:[#allocation7 + $0x3c8] sm:$0xff]
    %v462 = vld [vmem:[#allocation7 + $0x3d0] sm:$0xff]
    %v463 = vld [vmem:[#allocation7 + $0x3d8] sm:$0xff]
    %v464 = vld [vmem:[#allocation7 + $0x3e0] sm:$0xff]
    %v465 = vld [vmem:[#allocation7 + $0x3e8] sm:$0xff]
    %v466 = vld [vmem:[#allocation7 + $0x3f0] sm:$0xff]
    %v467 = vld [vmem:[#allocation7 + $0x3f8] sm:$0xff]
    %v468 = vld [vmem:[#allocation7 + $0x400] sm:$0xff]
    %v469 = vld [vmem:[#allocation7 + $0x408] sm:$0xff]
    %v470 = vld [vmem:[#allocation7 + $0x410] sm:$0xff]
    %v471 = vld [vmem:[#allocation7 + $0x418] sm:$0xff]
    %v472 = vld [vmem:[#allocation7 + $0x420] sm:$0xff]
    %v473 = vld [vmem:[#allocation7 + $0x428] sm:$0xff]
    %v474 = vld [vmem:[#allocation7 + $0x430] sm:$0xff]
    %v475 = vld [vmem:[#allocation7 + $0x438] sm:$0xff]
    %v476 = vld [vmem:[#allocation7 + $0x440] sm:$0xff]
    %v477 = vld [vmem:[#allocation7 + $0x448] sm:$0xff]
    %v478 = vld [vmem:[#allocation7 + $0x450] sm:$0xff]
    %v479 = vld [vmem:[#allocation7 + $0x458] sm:$0xff]
    %v480 = vld [vmem:[#allocation7 + $0x460] sm:$0xff]
    %v481 = vld [vmem:[#allocation7 + $0x468] sm:$0xff]
    %v482 = vld [vmem:[#allocation7 + $0x470] sm:$0xff]
    %v483 = vld [vmem:[#allocation7 + $0x478] sm:$0xff]
    %v484 = vld [vmem:[#allocation7 + $0x480] sm:$0xff]
    %v485 = vld [vmem:[#allocation7 + $0x488] sm:$0xff]
    %v486 = vld [vmem:[#allocation7 + $0x490] sm:$0xff]
    %v487 = vld [vmem:[#allocation7 + $0x498] sm:$0xff]
    %v488 = vld [vmem:[#allocation7 + $0x4a0] sm:$0xff]
    %v489 = vld [vmem:[#allocation7 + $0x4a8] sm:$0xff]
    %v490 = vld [vmem:[#allocation7 + $0x4b0] sm:$0xff]
    %v491 = vld [vmem:[#allocation7 + $0x4b8] sm:$0xff]
    %v492 = vld [vmem:[#allocation7 + $0x4c0] sm:$0xff]
    %v493 = vld [vmem:[#allocation7 + $0x4c8] sm:$0xff]
    %v494 = vld [vmem:[#allocation7 + $0x4d0] sm:$0xff]
    %v495 = vld [vmem:[#allocation7 + $0x4d8] sm:$0xff]
    %v496 = vld [vmem:[#allocation7 + $0x4e0] sm:$0xff]
    %v497 = vld [vmem:[#allocation7 + $0x4e8] sm:$0xff]
    %v498 = vld [vmem:[#allocation7 + $0x4f0] sm:$0xff]
    %v499 = vld [vmem:[#allocation7 + $0x4f8] sm:$0xff]
    %v500 = vld [vmem:[#allocation7 + $0x500] sm:$0xff]
    %v501 = vld [vmem:[#allocation7 + $0x508] sm:$0xff]
    %v502 = vld [vmem:[#allocation7 + $0x510] sm:$0xff]
    %v503 = vld [vmem:[#allocation7 + $0x518] sm:$0xff]
    %v504 = vld [vmem:[#allocation7 + $0x520] sm:$0xff]
    %v505 = vld [vmem:[#allocation7 + $0x528] sm:$0xff]
    %v506 = vld [vmem:[#allocation7 + $0x530] sm:$0xff]
    %v507 = vld [vmem:[#allocation7 + $0x538] sm:$0xff]
    %v508 = vld [vmem:[#allocation7 + $0x540] sm:$0xff]
    %v509 = vld [vmem:[#allocation7 + $0x548] sm:$0xff]
    %v510 = vld [vmem:[#allocation7 + $0x550] sm:$0xff]
    %v511 = vld [vmem:[#allocation7 + $0x558] sm:$0xff]
    %v512 = vld [vmem:[#allocation7 + $0x560] sm:$0xff]
    %v513 = vld [vmem:[#allocation7 + $0x568] sm:$0xff]
    %v514 = vld [vmem:[#allocation7 + $0x570] sm:$0xff]
    %v515 = vld [vmem:[#allocation7 + $0x578] sm:$0xff]
    %v516 = vld [vmem:[#allocation7 + $0x580] sm:$0xff]
    %v517 = vld [vmem:[#allocation7 + $0x588] sm:$0xff]
    %v518 = vld [vmem:[#allocation7 + $0x590] sm:$0xff]
    %v519 = vld [vmem:[#allocation7 + $0x598] sm:$0xff]
    %v520 = vld [vmem:[#allocation7 + $0x5a0] sm:$0xff]
    %v521 = vld [vmem:[#allocation7 + $0x5a8] sm:$0xff]
    %v522 = vld [vmem:[#allocation7 + $0x5b0] sm:$0xff]
    %v523 = vld [vmem:[#allocation7 + $0x5b8] sm:$0xff]
    %v524 = vld [vmem:[#allocation7 + $0x5c0] sm:$0xff]
    %v525 = vld [vmem:[#allocation7 + $0x5c8] sm:$0xff]
    %v526 = vld [vmem:[#allocation7 + $0x5d0] sm:$0xff]
    %v527 = vld [vmem:[#allocation7 + $0x5d8] sm:$0xff]
    %v528 = vld [vmem:[#allocation7 + $0x5e0] sm:$0xff]
    %v529 = vld [vmem:[#allocation7 + $0x5e8] sm:$0xff]
    %v530 = vld [vmem:[#allocation7 + $0x5f0] sm:$0xff]
    %v531 = vld [vmem:[#allocation7 + $0x5f8] sm:$0xff]
    %v532 = vld [vmem:[#allocation7 + $0x600] sm:$0xff]
    %v533 = vld [vmem:[#allocation7 + $0x608] sm:$0xff]
    %v534 = vld [vmem:[#allocation7 + $0x610] sm:$0xff]
    %v535 = vld [vmem:[#allocation7 + $0x618] sm:$0xff]
    %v536 = vld [vmem:[#allocation7 + $0x620] sm:$0xff]
    %v537 = vld [vmem:[#allocation7 + $0x628] sm:$0xff]
    %v538 = vld [vmem:[#allocation7 + $0x630] sm:$0xff]
    %v539 = vld [vmem:[#allocation7 + $0x638] sm:$0xff]
    %v540 = vld [vmem:[#allocation7 + $0x640] sm:$0xff]
    %v541 = vld [vmem:[#allocation7 + $0x648] sm:$0xff]
    %v542 = vld [vmem:[#allocation7 + $0x650] sm:$0xff]
    %v543 = vld [vmem:[#allocation7 + $0x658] sm:$0xff]
    %v544 = vld [vmem:[#allocation7 + $0x660] sm:$0xff]
    %v545 = vld [vmem:[#allocation7 + $0x668] sm:$0xff]
    %v546 = vld [vmem:[#allocation7 + $0x670] sm:$0xff]
    %v547 = vld [vmem:[#allocation7 + $0x678] sm:$0xff]
    %v548 = vld [vmem:[#allocation7 + $0x680] sm:$0xff]
    %v549 = vld [vmem:[#allocation7 + $0x688] sm:$0xff]
    %v550 = vld [vmem:[#allocation7 + $0x690] sm:$0xff]
    %v551 = vld [vmem:[#allocation7 + $0x698] sm:$0xff]
    %v552 = vld [vmem:[#allocation7 + $0x6a0] sm:$0xff]
    %v553 = vld [vmem:[#allocation7 + $0x6a8] sm:$0xff]
    %v554 = vld [vmem:[#allocation7 + $0x6b0] sm:$0xff]
    %v555 = vld [vmem:[#allocation7 + $0x6b8] sm:$0xff]
    %v556 = vld [vmem:[#allocation7 + $0x6c0] sm:$0xff]
    %v557 = vld [vmem:[#allocation7 + $0x6c8] sm:$0xff]
    %v558 = vld [vmem:[#allocation7 + $0x6d0] sm:$0xff]
    %v559 = vld [vmem:[#allocation7 + $0x6d8] sm:$0xff]
    %v560 = vld [vmem:[#allocation7 + $0x6e0] sm:$0xff]
    %v561 = vld [vmem:[#allocation7 + $0x6e8] sm:$0xff]
    %v562 = vld [vmem:[#allocation7 + $0x6f0] sm:$0xff]
    %v563 = vld [vmem:[#allocation7 + $0x6f8] sm:$0xff]
    %v564 = vld [vmem:[#allocation7 + $0x700] sm:$0xff]
    %v565 = vld [vmem:[#allocation7 + $0x708] sm:$0xff]
    %v566 = vld [vmem:[#allocation7 + $0x710] sm:$0xff]
    %v567 = vld [vmem:[#allocation7 + $0x718] sm:$0xff]
    %v568 = vld [vmem:[#allocation7 + $0x720] sm:$0xff]
    %v569 = vld [vmem:[#allocation7 + $0x728] sm:$0xff]
    %v570 = vld [vmem:[#allocation7 + $0x730] sm:$0xff]
    %v571 = vld [vmem:[#allocation7 + $0x738] sm:$0xff]
    %v572 = vld [vmem:[#allocation7 + $0x740] sm:$0xff]
    %v573 = vld [vmem:[#allocation7 + $0x748] sm:$0xff]
    %v574 = vld [vmem:[#allocation7 + $0x750] sm:$0xff]
    %v575 = vld [vmem:[#allocation7 + $0x758] sm:$0xff]
    %v576 = vld [vmem:[#allocation7 + $0x760] sm:$0xff]
    %v577 = vld [vmem:[#allocation7 + $0x768] sm:$0xff]
    %v578 = vld [vmem:[#allocation7 + $0x770] sm:$0xff]
    %v579 = vld [vmem:[#allocation7 + $0x778] sm:$0xff]
    %v580 = vld [vmem:[#allocation7 + $0x780] sm:$0xff]
    %v581 = vld [vmem:[#allocation7 + $0x788] sm:$0xff]
    %v582 = vld [vmem:[#allocation7 + $0x790] sm:$0xff]
    %v583 = vld [vmem:[#allocation7 + $0x798] sm:$0xff]
    %v584 = vld [vmem:[#allocation7 + $0x7a0] sm:$0xff]
    %v585 = vld [vmem:[#allocation7 + $0x7a8] sm:$0xff]
    %v586 = vld [vmem:[#allocation7 + $0x7b0] sm:$0xff]
    %v587 = vld [vmem:[#allocation7 + $0x7b8] sm:$0xff]
    %v588 = vld [vmem:[#allocation7 + $0x7c0] sm:$0xff]
    %v589 = vld [vmem:[#allocation7 + $0x7c8] sm:$0xff]
    %v590 = vld [vmem:[#allocation7 + $0x7d0] sm:$0xff]
    %v591 = vld [vmem:[#allocation7 + $0x7d8] sm:$0xff]
    %v592 = vld [vmem:[#allocation7 + $0x7e0] sm:$0xff]
    %v593 = vld [vmem:[#allocation7 + $0x7e8] sm:$0xff]
    %v594 = vld [vmem:[#allocation7 + $0x7f0] sm:$0xff]
    %v595 = vld [vmem:[#allocation7 + $0x7f8] sm:$0xff]
    %v596 = vld [vmem:[%s5] sm:$0xff]
    %v598 = vlaneseq
    %v599 = vshrl.u32 %v598, 7
    %v600 = vsub.s32 0, %v599
    %v601 = vrot.slane %v596, %v600
    %v602 = vlaneseq
    %v603 = vshrl.u32 %v602, 7
    %v604 = vsub.s32 1, %v603
    %v605 = vrot.slane %v596, %v604
    %v606 = vlaneseq
    %v607 = vshrl.u32 %v606, 7
    %v608 = vsub.s32 2, %v607
    %v609 = vrot.slane %v596, %v608
    %v610 = vlaneseq
    %v611 = vshrl.u32 %v610, 7
    %v612 = vsub.s32 3, %v611
    %v613 = vrot.slane %v596, %v612
    %v614 = vlaneseq
    %v615 = vshrl.u32 %v614, 7
    %v616 = vsub.s32 4, %v615
    %v617 = vrot.slane %v596, %v616
    %v618 = vlaneseq
    %v619 = vshrl.u32 %v618, 7
    %v620 = vsub.s32 5, %v619
    %v621 = vrot.slane %v596, %v620
    %v622 = vlaneseq
    %v623 = vshrl.u32 %v622, 7
    %v624 = vsub.s32 6, %v623
    %v625 = vrot.slane %v596, %v624
    %v626 = vlaneseq
    %v627 = vshrl.u32 %v626, 7
    %v628 = vsub.s32 7, %v627
    %v629 = vrot.slane %v596, %v628
    %v894 = vunpack.c.l.b16 %v340
    %v895 = vunpack.c.h.b16 %v340
    %v896 = vunpack.c.l.b16 %v341
    %v897 = vunpack.c.h.b16 %v341
    %v898 = vunpack.c.l.b16 %v342
    %v899 = vunpack.c.h.b16 %v342
    %v900 = vunpack.c.l.b16 %v343
    %v901 = vunpack.c.h.b16 %v343
    %v902 = vunpack.c.l.b16 %v344
    %v903 = vunpack.c.h.b16 %v344
    %v904 = vunpack.c.l.b16 %v345
    %v905 = vunpack.c.h.b16 %v345
    %v906 = vunpack.c.l.b16 %v346
    %v907 = vunpack.c.h.b16 %v346
    %v908 = vunpack.c.l.b16 %v347
    %v909 = vunpack.c.h.b16 %v347
    %v910 = vunpack.c.l.b16 %v348
    %v911 = vunpack.c.h.b16 %v348
    %v912 = vunpack.c.l.b16 %v349
    %v913 = vunpack.c.h.b16 %v349
    %v914 = vunpack.c.l.b16 %v350
    %v915 = vunpack.c.h.b16 %v350
    %v916 = vunpack.c.l.b16 %v351
    %v917 = vunpack.c.h.b16 %v351
    %v918 = vunpack.c.l.b16 %v352
    %v919 = vunpack.c.h.b16 %v352
    %v920 = vunpack.c.l.b16 %v353
    %v921 = vunpack.c.h.b16 %v353
    %v922 = vunpack.c.l.b16 %v354
    %v923 = vunpack.c.h.b16 %v354
    %v924 = vunpack.c.l.b16 %v355
    %v925 = vunpack.c.h.b16 %v355
    %v926 = vunpack.c.l.b16 %v356
    %v927 = vunpack.c.h.b16 %v356
    %v928 = vunpack.c.l.b16 %v357
    %v929 = vunpack.c.h.b16 %v357
    %v930 = vunpack.c.l.b16 %v358
    %v931 = vunpack.c.h.b16 %v358
    %v932 = vunpack.c.l.b16 %v359
    %v933 = vunpack.c.h.b16 %v359
    %v934 = vunpack.c.l.b16 %v360
    %v935 = vunpack.c.h.b16 %v360
    %v936 = vunpack.c.l.b16 %v361
    %v937 = vunpack.c.h.b16 %v361
    %v938 = vunpack.c.l.b16 %v362
    %v939 = vunpack.c.h.b16 %v362
    %v940 = vunpack.c.l.b16 %v363
    %v941 = vunpack.c.h.b16 %v363
    %v942 = vunpack.c.l.b16 %v364
    %v943 = vunpack.c.h.b16 %v364
    %v944 = vunpack.c.l.b16 %v365
    %v945 = vunpack.c.h.b16 %v365
    %v946 = vunpack.c.l.b16 %v366
    %v947 = vunpack.c.h.b16 %v366
    %v948 = vunpack.c.l.b16 %v367
    %v949 = vunpack.c.h.b16 %v367
    %v950 = vunpack.c.l.b16 %v368
    %v951 = vunpack.c.h.b16 %v368
    %v952 = vunpack.c.l.b16 %v369
    %v953 = vunpack.c.h.b16 %v369
    %v954 = vunpack.c.l.b16 %v370
    %v955 = vunpack.c.h.b16 %v370
    %v956 = vunpack.c.l.b16 %v371
    %v957 = vunpack.c.h.b16 %v371
    %v958 = vunpack.c.l.b16 %v372
    %v959 = vunpack.c.h.b16 %v372
    %v960 = vunpack.c.l.b16 %v373
    %v961 = vunpack.c.h.b16 %v373
    %v962 = vunpack.c.l.b16 %v374
    %v963 = vunpack.c.h.b16 %v374
    %v964 = vunpack.c.l.b16 %v375
    %v965 = vunpack.c.h.b16 %v375
    %v966 = vunpack.c.l.b16 %v376
    %v967 = vunpack.c.h.b16 %v376
    %v968 = vunpack.c.l.b16 %v377
    %v969 = vunpack.c.h.b16 %v377
    %v970 = vunpack.c.l.b16 %v378
    %v971 = vunpack.c.h.b16 %v378
    %v972 = vunpack.c.l.b16 %v379
    %v973 = vunpack.c.h.b16 %v379
    %v974 = vunpack.c.l.b16 %v380
    %v975 = vunpack.c.h.b16 %v380
    %v976 = vunpack.c.l.b16 %v381
    %v977 = vunpack.c.h.b16 %v381
    %v978 = vunpack.c.l.b16 %v382
    %v979 = vunpack.c.h.b16 %v382
    %v980 = vunpack.c.l.b16 %v383
    %v981 = vunpack.c.h.b16 %v383
    %v982 = vunpack.c.l.b16 %v384
    %v983 = vunpack.c.h.b16 %v384
    %v984 = vunpack.c.l.b16 %v385
    %v985 = vunpack.c.h.b16 %v385
    %v986 = vunpack.c.l.b16 %v386
    %v987 = vunpack.c.h.b16 %v386
    %v988 = vunpack.c.l.b16 %v387
    %v989 = vunpack.c.h.b16 %v387
    %v990 = vunpack.c.l.b16 %v388
    %v991 = vunpack.c.h.b16 %v388
    %v992 = vunpack.c.l.b16 %v389
    %v993 = vunpack.c.h.b16 %v389
    %v994 = vunpack.c.l.b16 %v390
    %v995 = vunpack.c.h.b16 %v390
    %v996 = vunpack.c.l.b16 %v391
    %v997 = vunpack.c.h.b16 %v391
    %v998 = vunpack.c.l.b16 %v392
    %v999 = vunpack.c.h.b16 %v392
    %v1000 = vunpack.c.l.b16 %v393
    %v1001 = vunpack.c.h.b16 %v393
    %v1002 = vunpack.c.l.b16 %v394
    %v1003 = vunpack.c.h.b16 %v394
    %v1004 = vunpack.c.l.b16 %v395
    %v1005 = vunpack.c.h.b16 %v395
    %v1006 = vunpack.c.l.b16 %v396
    %v1007 = vunpack.c.h.b16 %v396
    %v1008 = vunpack.c.l.b16 %v397
    %v1009 = vunpack.c.h.b16 %v397
    %v1010 = vunpack.c.l.b16 %v398
    %v1011 = vunpack.c.h.b16 %v398
    %v1012 = vunpack.c.l.b16 %v399
    %v1013 = vunpack.c.h.b16 %v399
    %v1014 = vunpack.c.l.b16 %v400
    %v1015 = vunpack.c.h.b16 %v400
    %v1016 = vunpack.c.l.b16 %v401
    %v1017 = vunpack.c.h.b16 %v401
    %v1018 = vunpack.c.l.b16 %v402
    %v1019 = vunpack.c.h.b16 %v402
    %v1020 = vunpack.c.l.b16 %v403
    %v1021 = vunpack.c.h.b16 %v403
    %v1022 = vunpack.c.l.b16 %v404
    %v1023 = vunpack.c.h.b16 %v404
    %v1024 = vunpack.c.l.b16 %v405
    %v1025 = vunpack.c.h.b16 %v405
    %v1026 = vunpack.c.l.b16 %v406
    %v1027 = vunpack.c.h.b16 %v406
    %v1028 = vunpack.c.l.b16 %v407
    %v1029 = vunpack.c.h.b16 %v407
    %v1030 = vunpack.c.l.b16 %v408
    %v1031 = vunpack.c.h.b16 %v408
    %v1032 = vunpack.c.l.b16 %v409
    %v1033 = vunpack.c.h.b16 %v409
    %v1034 = vunpack.c.l.b16 %v410
    %v1035 = vunpack.c.h.b16 %v410
    %v1036 = vunpack.c.l.b16 %v411
    %v1037 = vunpack.c.h.b16 %v411
    %v1038 = vunpack.c.l.b16 %v412
    %v1039 = vunpack.c.h.b16 %v412
    %v1040 = vunpack.c.l.b16 %v413
    %v1041 = vunpack.c.h.b16 %v413
    %v1042 = vunpack.c.l.b16 %v414
    %v1043 = vunpack.c.h.b16 %v414
    %v1044 = vunpack.c.l.b16 %v415
    %v1045 = vunpack.c.h.b16 %v415
    %v1046 = vunpack.c.l.b16 %v416
    %v1047 = vunpack.c.h.b16 %v416
    %v1048 = vunpack.c.l.b16 %v417
    %v1049 = vunpack.c.h.b16 %v417
    %v1050 = vunpack.c.l.b16 %v418
    %v1051 = vunpack.c.h.b16 %v418
    %v1052 = vunpack.c.l.b16 %v419
    %v1053 = vunpack.c.h.b16 %v419
    %v1054 = vunpack.c.l.b16 %v420
    %v1055 = vunpack.c.h.b16 %v420
    %v1056 = vunpack.c.l.b16 %v421
    %v1057 = vunpack.c.h.b16 %v421
    %v1058 = vunpack.c.l.b16 %v422
    %v1059 = vunpack.c.h.b16 %v422
    %v1060 = vunpack.c.l.b16 %v423
    %v1061 = vunpack.c.h.b16 %v423
    %v1062 = vunpack.c.l.b16 %v424
    %v1063 = vunpack.c.h.b16 %v424
    %v1064 = vunpack.c.l.b16 %v425
    %v1065 = vunpack.c.h.b16 %v425
    %v1066 = vunpack.c.l.b16 %v426
    %v1067 = vunpack.c.h.b16 %v426
    %v1068 = vunpack.c.l.b16 %v427
    %v1069 = vunpack.c.h.b16 %v427
    %v1070 = vunpack.c.l.b16 %v428
    %v1071 = vunpack.c.h.b16 %v428
    %v1072 = vunpack.c.l.b16 %v429
    %v1073 = vunpack.c.h.b16 %v429
    %v1074 = vunpack.c.l.b16 %v430
    %v1075 = vunpack.c.h.b16 %v430
    %v1076 = vunpack.c.l.b16 %v431
    %v1077 = vunpack.c.h.b16 %v431
    %v1078 = vunpack.c.l.b16 %v432
    %v1079 = vunpack.c.h.b16 %v432
    %v1080 = vunpack.c.l.b16 %v433
    %v1081 = vunpack.c.h.b16 %v433
    %v1082 = vunpack.c.l.b16 %v434
    %v1083 = vunpack.c.h.b16 %v434
    %v1084 = vunpack.c.l.b16 %v435
    %v1085 = vunpack.c.h.b16 %v435
    %v1086 = vunpack.c.l.b16 %v436
    %v1087 = vunpack.c.h.b16 %v436
    %v1088 = vunpack.c.l.b16 %v437
    %v1089 = vunpack.c.h.b16 %v437
    %v1090 = vunpack.c.l.b16 %v438
    %v1091 = vunpack.c.h.b16 %v438
    %v1092 = vunpack.c.l.b16 %v439
    %v1093 = vunpack.c.h.b16 %v439
    %v1094 = vunpack.c.l.b16 %v440
    %v1095 = vunpack.c.h.b16 %v440
    %v1096 = vunpack.c.l.b16 %v441
    %v1097 = vunpack.c.h.b16 %v441
    %v1098 = vunpack.c.l.b16 %v442
    %v1099 = vunpack.c.h.b16 %v442
    %v1100 = vunpack.c.l.b16 %v443
    %v1101 = vunpack.c.h.b16 %v443
    %v1102 = vunpack.c.l.b16 %v444
    %v1103 = vunpack.c.h.b16 %v444
    %v1104 = vunpack.c.l.b16 %v445
    %v1105 = vunpack.c.h.b16 %v445
    %v1106 = vunpack.c.l.b16 %v446
    %v1107 = vunpack.c.h.b16 %v446
    %v1108 = vunpack.c.l.b16 %v447
    %v1109 = vunpack.c.h.b16 %v447
    %v1110 = vunpack.c.l.b16 %v448
    %v1111 = vunpack.c.h.b16 %v448
    %v1112 = vunpack.c.l.b16 %v449
    %v1113 = vunpack.c.h.b16 %v449
    %v1114 = vunpack.c.l.b16 %v450
    %v1115 = vunpack.c.h.b16 %v450
    %v1116 = vunpack.c.l.b16 %v451
    %v1117 = vunpack.c.h.b16 %v451
    %v1118 = vunpack.c.l.b16 %v452
    %v1119 = vunpack.c.h.b16 %v452
    %v1120 = vunpack.c.l.b16 %v453
    %v1121 = vunpack.c.h.b16 %v453
    %v1122 = vunpack.c.l.b16 %v454
    %v1123 = vunpack.c.h.b16 %v454
    %v1124 = vunpack.c.l.b16 %v455
    %v1125 = vunpack.c.h.b16 %v455
    %v1126 = vunpack.c.l.b16 %v456
    %v1127 = vunpack.c.h.b16 %v456
    %v1128 = vunpack.c.l.b16 %v457
    %v1129 = vunpack.c.h.b16 %v457
    %v1130 = vunpack.c.l.b16 %v458
    %v1131 = vunpack.c.h.b16 %v458
    %v1132 = vunpack.c.l.b16 %v459
    %v1133 = vunpack.c.h.b16 %v459
    %v1134 = vunpack.c.l.b16 %v460
    %v1135 = vunpack.c.h.b16 %v460
    %v1136 = vunpack.c.l.b16 %v461
    %v1137 = vunpack.c.h.b16 %v461
    %v1138 = vunpack.c.l.b16 %v462
    %v1139 = vunpack.c.h.b16 %v462
    %v1140 = vunpack.c.l.b16 %v463
    %v1141 = vunpack.c.h.b16 %v463
    %v1142 = vunpack.c.l.b16 %v464
    %v1143 = vunpack.c.h.b16 %v464
    %v1144 = vunpack.c.l.b16 %v465
    %v1145 = vunpack.c.h.b16 %v465
    %v1146 = vunpack.c.l.b16 %v466
    %v1147 = vunpack.c.h.b16 %v466
    %v1148 = vunpack.c.l.b16 %v467
    %v1149 = vunpack.c.h.b16 %v467
    %v1150 = vunpack.c.l.b16 %v468
    %v1151 = vunpack.c.h.b16 %v468
    %v1152 = vunpack.c.l.b16 %v469
    %v1153 = vunpack.c.h.b16 %v469
    %v1154 = vunpack.c.l.b16 %v470
    %v1155 = vunpack.c.h.b16 %v470
    %v1156 = vunpack.c.l.b16 %v471
    %v1157 = vunpack.c.h.b16 %v471
    %v1158 = vunpack.c.l.b16 %v472
    %v1159 = vunpack.c.h.b16 %v472
    %v1160 = vunpack.c.l.b16 %v473
    %v1161 = vunpack.c.h.b16 %v473
    %v1162 = vunpack.c.l.b16 %v474
    %v1163 = vunpack.c.h.b16 %v474
    %v1164 = vunpack.c.l.b16 %v475
    %v1165 = vunpack.c.h.b16 %v475
    %v1166 = vunpack.c.l.b16 %v476
    %v1167 = vunpack.c.h.b16 %v476
    %v1168 = vunpack.c.l.b16 %v477
    %v1169 = vunpack.c.h.b16 %v477
    %v1170 = vunpack.c.l.b16 %v478
    %v1171 = vunpack.c.h.b16 %v478
    %v1172 = vunpack.c.l.b16 %v479
    %v1173 = vunpack.c.h.b16 %v479
    %v1174 = vunpack.c.l.b16 %v480
    %v1175 = vunpack.c.h.b16 %v480
    %v1176 = vunpack.c.l.b16 %v481
    %v1177 = vunpack.c.h.b16 %v481
    %v1178 = vunpack.c.l.b16 %v482
    %v1179 = vunpack.c.h.b16 %v482
    %v1180 = vunpack.c.l.b16 %v483
    %v1181 = vunpack.c.h.b16 %v483
    %v1182 = vunpack.c.l.b16 %v484
    %v1183 = vunpack.c.h.b16 %v484
    %v1184 = vunpack.c.l.b16 %v485
    %v1185 = vunpack.c.h.b16 %v485
    %v1186 = vunpack.c.l.b16 %v486
    %v1187 = vunpack.c.h.b16 %v486
    %v1188 = vunpack.c.l.b16 %v487
    %v1189 = vunpack.c.h.b16 %v487
    %v1190 = vunpack.c.l.b16 %v488
    %v1191 = vunpack.c.h.b16 %v488
    %v1192 = vunpack.c.l.b16 %v489
    %v1193 = vunpack.c.h.b16 %v489
    %v1194 = vunpack.c.l.b16 %v490
    %v1195 = vunpack.c.h.b16 %v490
    %v1196 = vunpack.c.l.b16 %v491
    %v1197 = vunpack.c.h.b16 %v491
    %v1198 = vunpack.c.l.b16 %v492
    %v1199 = vunpack.c.h.b16 %v492
    %v1200 = vunpack.c.l.b16 %v493
    %v1201 = vunpack.c.h.b16 %v493
    %v1202 = vunpack.c.l.b16 %v494
    %v1203 = vunpack.c.h.b16 %v494
    %v1204 = vunpack.c.l.b16 %v495
    %v1205 = vunpack.c.h.b16 %v495
    %v1206 = vunpack.c.l.b16 %v496
    %v1207 = vunpack.c.h.b16 %v496
    %v1208 = vunpack.c.l.b16 %v497
    %v1209 = vunpack.c.h.b16 %v497
    %v1210 = vunpack.c.l.b16 %v498
    %v1211 = vunpack.c.h.b16 %v498
    %v1212 = vunpack.c.l.b16 %v499
    %v1213 = vunpack.c.h.b16 %v499
    %v1214 = vunpack.c.l.b16 %v500
    %v1215 = vunpack.c.h.b16 %v500
    %v1216 = vunpack.c.l.b16 %v501
    %v1217 = vunpack.c.h.b16 %v501
    %v1218 = vunpack.c.l.b16 %v502
    %v1219 = vunpack.c.h.b16 %v502
    %v1220 = vunpack.c.l.b16 %v503
    %v1221 = vunpack.c.h.b16 %v503
    %v1222 = vunpack.c.l.b16 %v504
    %v1223 = vunpack.c.h.b16 %v504
    %v1224 = vunpack.c.l.b16 %v505
    %v1225 = vunpack.c.h.b16 %v505
    %v1226 = vunpack.c.l.b16 %v506
    %v1227 = vunpack.c.h.b16 %v506
    %v1228 = vunpack.c.l.b16 %v507
    %v1229 = vunpack.c.h.b16 %v507
    %v1230 = vunpack.c.l.b16 %v508
    %v1231 = vunpack.c.h.b16 %v508
    %v1232 = vunpack.c.l.b16 %v509
    %v1233 = vunpack.c.h.b16 %v509
    %v1234 = vunpack.c.l.b16 %v510
    %v1235 = vunpack.c.h.b16 %v510
    %v1236 = vunpack.c.l.b16 %v511
    %v1237 = vunpack.c.h.b16 %v511
    %v1238 = vunpack.c.l.b16 %v512
    %v1239 = vunpack.c.h.b16 %v512
    %v1240 = vunpack.c.l.b16 %v513
    %v1241 = vunpack.c.h.b16 %v513
    %v1242 = vunpack.c.l.b16 %v514
    %v1243 = vunpack.c.h.b16 %v514
    %v1244 = vunpack.c.l.b16 %v515
    %v1245 = vunpack.c.h.b16 %v515
    %v1246 = vunpack.c.l.b16 %v516
    %v1247 = vunpack.c.h.b16 %v516
    %v1248 = vunpack.c.l.b16 %v517
    %v1249 = vunpack.c.h.b16 %v517
    %v1250 = vunpack.c.l.b16 %v518
    %v1251 = vunpack.c.h.b16 %v518
    %v1252 = vunpack.c.l.b16 %v519
    %v1253 = vunpack.c.h.b16 %v519
    %v1254 = vunpack.c.l.b16 %v520
    %v1255 = vunpack.c.h.b16 %v520
    %v1256 = vunpack.c.l.b16 %v521
    %v1257 = vunpack.c.h.b16 %v521
    %v1258 = vunpack.c.l.b16 %v522
    %v1259 = vunpack.c.h.b16 %v522
    %v1260 = vunpack.c.l.b16 %v523
    %v1261 = vunpack.c.h.b16 %v523
    %v1262 = vunpack.c.l.b16 %v524
    %v1263 = vunpack.c.h.b16 %v524
    %v1264 = vunpack.c.l.b16 %v525
    %v1265 = vunpack.c.h.b16 %v525
    %v1266 = vunpack.c.l.b16 %v526
    %v1267 = vunpack.c.h.b16 %v526
    %v1268 = vunpack.c.l.b16 %v527
    %v1269 = vunpack.c.h.b16 %v527
    %v1270 = vunpack.c.l.b16 %v528
    %v1271 = vunpack.c.h.b16 %v528
    %v1272 = vunpack.c.l.b16 %v529
    %v1273 = vunpack.c.h.b16 %v529
    %v1274 = vunpack.c.l.b16 %v530
    %v1275 = vunpack.c.h.b16 %v530
    %v1276 = vunpack.c.l.b16 %v531
    %v1277 = vunpack.c.h.b16 %v531
    %v1278 = vunpack.c.l.b16 %v532
    %v1279 = vunpack.c.h.b16 %v532
    %v1280 = vunpack.c.l.b16 %v533
    %v1281 = vunpack.c.h.b16 %v533
    %v1282 = vunpack.c.l.b16 %v534
    %v1283 = vunpack.c.h.b16 %v534
    %v1284 = vunpack.c.l.b16 %v535
    %v1285 = vunpack.c.h.b16 %v535
    %v1286 = vunpack.c.l.b16 %v536
    %v1287 = vunpack.c.h.b16 %v536
    %v1288 = vunpack.c.l.b16 %v537
    %v1289 = vunpack.c.h.b16 %v537
    %v1290 = vunpack.c.l.b16 %v538
    %v1291 = vunpack.c.h.b16 %v538
    %v1292 = vunpack.c.l.b16 %v539
    %v1293 = vunpack.c.h.b16 %v539
    %v1294 = vunpack.c.l.b16 %v540
    %v1295 = vunpack.c.h.b16 %v540
    %v1296 = vunpack.c.l.b16 %v541
    %v1297 = vunpack.c.h.b16 %v541
    %v1298 = vunpack.c.l.b16 %v542
    %v1299 = vunpack.c.h.b16 %v542
    %v1300 = vunpack.c.l.b16 %v543
    %v1301 = vunpack.c.h.b16 %v543
    %v1302 = vunpack.c.l.b16 %v544
    %v1303 = vunpack.c.h.b16 %v544
    %v1304 = vunpack.c.l.b16 %v545
    %v1305 = vunpack.c.h.b16 %v545
    %v1306 = vunpack.c.l.b16 %v546
    %v1307 = vunpack.c.h.b16 %v546
    %v1308 = vunpack.c.l.b16 %v547
    %v1309 = vunpack.c.h.b16 %v547
    %v1310 = vunpack.c.l.b16 %v548
    %v1311 = vunpack.c.h.b16 %v548
    %v1312 = vunpack.c.l.b16 %v549
    %v1313 = vunpack.c.h.b16 %v549
    %v1314 = vunpack.c.l.b16 %v550
    %v1315 = vunpack.c.h.b16 %v550
    %v1316 = vunpack.c.l.b16 %v551
    %v1317 = vunpack.c.h.b16 %v551
    %v1318 = vunpack.c.l.b16 %v552
    %v1319 = vunpack.c.h.b16 %v552
    %v1320 = vunpack.c.l.b16 %v553
    %v1321 = vunpack.c.h.b16 %v553
    %v1322 = vunpack.c.l.b16 %v554
    %v1323 = vunpack.c.h.b16 %v554
    %v1324 = vunpack.c.l.b16 %v555
    %v1325 = vunpack.c.h.b16 %v555
    %v1326 = vunpack.c.l.b16 %v556
    %v1327 = vunpack.c.h.b16 %v556
    %v1328 = vunpack.c.l.b16 %v557
    %v1329 = vunpack.c.h.b16 %v557
    %v1330 = vunpack.c.l.b16 %v558
    %v1331 = vunpack.c.h.b16 %v558
    %v1332 = vunpack.c.l.b16 %v559
    %v1333 = vunpack.c.h.b16 %v559
    %v1334 = vunpack.c.l.b16 %v560
    %v1335 = vunpack.c.h.b16 %v560
    %v1336 = vunpack.c.l.b16 %v561
    %v1337 = vunpack.c.h.b16 %v561
    %v1338 = vunpack.c.l.b16 %v562
    %v1339 = vunpack.c.h.b16 %v562
    %v1340 = vunpack.c.l.b16 %v563
    %v1341 = vunpack.c.h.b16 %v563
    %v1342 = vunpack.c.l.b16 %v564
    %v1343 = vunpack.c.h.b16 %v564
    %v1344 = vunpack.c.l.b16 %v565
    %v1345 = vunpack.c.h.b16 %v565
    %v1346 = vunpack.c.l.b16 %v566
    %v1347 = vunpack.c.h.b16 %v566
    %v1348 = vunpack.c.l.b16 %v567
    %v1349 = vunpack.c.h.b16 %v567
    %v1350 = vunpack.c.l.b16 %v568
    %v1351 = vunpack.c.h.b16 %v568
    %v1352 = vunpack.c.l.b16 %v569
    %v1353 = vunpack.c.h.b16 %v569
    %v1354 = vunpack.c.l.b16 %v570
    %v1355 = vunpack.c.h.b16 %v570
    %v1356 = vunpack.c.l.b16 %v571
    %v1357 = vunpack.c.h.b16 %v571
    %v1358 = vunpack.c.l.b16 %v572
    %v1359 = vunpack.c.h.b16 %v572
    %v1360 = vunpack.c.l.b16 %v573
    %v1361 = vunpack.c.h.b16 %v573
    %v1362 = vunpack.c.l.b16 %v574
    %v1363 = vunpack.c.h.b16 %v574
    %v1364 = vunpack.c.l.b16 %v575
    %v1365 = vunpack.c.h.b16 %v575
    %v1366 = vunpack.c.l.b16 %v576
    %v1367 = vunpack.c.h.b16 %v576
    %v1368 = vunpack.c.l.b16 %v577
    %v1369 = vunpack.c.h.b16 %v577
    %v1370 = vunpack.c.l.b16 %v578
    %v1371 = vunpack.c.h.b16 %v578
    %v1372 = vunpack.c.l.b16 %v579
    %v1373 = vunpack.c.h.b16 %v579
    %v1374 = vunpack.c.l.b16 %v580
    %v1375 = vunpack.c.h.b16 %v580
    %v1376 = vunpack.c.l.b16 %v581
    %v1377 = vunpack.c.h.b16 %v581
    %v1378 = vunpack.c.l.b16 %v582
    %v1379 = vunpack.c.h.b16 %v582
    %v1380 = vunpack.c.l.b16 %v583
    %v1381 = vunpack.c.h.b16 %v583
    %v1382 = vunpack.c.l.b16 %v584
    %v1383 = vunpack.c.h.b16 %v584
    %v1384 = vunpack.c.l.b16 %v585
    %v1385 = vunpack.c.h.b16 %v585
    %v1386 = vunpack.c.l.b16 %v586
    %v1387 = vunpack.c.h.b16 %v586
    %v1388 = vunpack.c.l.b16 %v587
    %v1389 = vunpack.c.h.b16 %v587
    %v1390 = vunpack.c.l.b16 %v588
    %v1391 = vunpack.c.h.b16 %v588
    %v1392 = vunpack.c.l.b16 %v589
    %v1393 = vunpack.c.h.b16 %v589
    %v1394 = vunpack.c.l.b16 %v590
    %v1395 = vunpack.c.h.b16 %v590
    %v1396 = vunpack.c.l.b16 %v591
    %v1397 = vunpack.c.h.b16 %v591
    %v1398 = vunpack.c.l.b16 %v592
    %v1399 = vunpack.c.h.b16 %v592
    %v1400 = vunpack.c.l.b16 %v593
    %v1401 = vunpack.c.h.b16 %v593
    %v1402 = vunpack.c.l.b16 %v594
    %v1403 = vunpack.c.h.b16 %v594
    %v1404 = vunpack.c.l.b16 %v595
    %v1405 = vunpack.c.h.b16 %v595
    %v1406 = vpack.c.b16 %v902, %v894
    %v1407 = vpack.c.b16 %v903, %v895
    %v1408 = vpack.c.b16 %v904, %v896
    %v1409 = vpack.c.b16 %v905, %v897
    %v1410 = vpack.c.b16 %v906, %v898
    %v1411 = vpack.c.b16 %v907, %v899
    %v1412 = vpack.c.b16 %v908, %v900
    %v1413 = vpack.c.b16 %v909, %v901
    %v1414 = vpack.c.b16 %v918, %v910
    %v1415 = vpack.c.b16 %v919, %v911
    %v1416 = vpack.c.b16 %v920, %v912
    %v1417 = vpack.c.b16 %v921, %v913
    %v1418 = vpack.c.b16 %v922, %v914
    %v1419 = vpack.c.b16 %v923, %v915
    %v1420 = vpack.c.b16 %v924, %v916
    %v1421 = vpack.c.b16 %v925, %v917
    %v1422 = vpack.c.b16 %v934, %v926
    %v1423 = vpack.c.b16 %v935, %v927
    %v1424 = vpack.c.b16 %v936, %v928
    %v1425 = vpack.c.b16 %v937, %v929
    %v1426 = vpack.c.b16 %v938, %v930
    %v1427 = vpack.c.b16 %v939, %v931
    %v1428 = vpack.c.b16 %v940, %v932
    %v1429 = vpack.c.b16 %v941, %v933
    %v1430 = vpack.c.b16 %v950, %v942
    %v1431 = vpack.c.b16 %v951, %v943
    %v1432 = vpack.c.b16 %v952, %v944
    %v1433 = vpack.c.b16 %v953, %v945
    %v1434 = vpack.c.b16 %v954, %v946
    %v1435 = vpack.c.b16 %v955, %v947
    %v1436 = vpack.c.b16 %v956, %v948
    %v1437 = vpack.c.b16 %v957, %v949
    %v1438 = vpack.c.b16 %v966, %v958
    %v1439 = vpack.c.b16 %v967, %v959
    %v1440 = vpack.c.b16 %v968, %v960
    %v1441 = vpack.c.b16 %v969, %v961
    %v1442 = vpack.c.b16 %v970, %v962
    %v1443 = vpack.c.b16 %v971, %v963
    %v1444 = vpack.c.b16 %v972, %v964
    %v1445 = vpack.c.b16 %v973, %v965
    %v1446 = vpack.c.b16 %v982, %v974
    %v1447 = vpack.c.b16 %v983, %v975
    %v1448 = vpack.c.b16 %v984, %v976
    %v1449 = vpack.c.b16 %v985, %v977
    %v1450 = vpack.c.b16 %v986, %v978
    %v1451 = vpack.c.b16 %v987, %v979
    %v1452 = vpack.c.b16 %v988, %v980
    %v1453 = vpack.c.b16 %v989, %v981
    %v1454 = vpack.c.b16 %v998, %v990
    %v1455 = vpack.c.b16 %v999, %v991
    %v1456 = vpack.c.b16 %v1000, %v992
    %v1457 = vpack.c.b16 %v1001, %v993
    %v1458 = vpack.c.b16 %v1002, %v994
    %v1459 = vpack.c.b16 %v1003, %v995
    %v1460 = vpack.c.b16 %v1004, %v996
    %v1461 = vpack.c.b16 %v1005, %v997
    %v1462 = vpack.c.b16 %v1014, %v1006
    %v1463 = vpack.c.b16 %v1015, %v1007
    %v1464 = vpack.c.b16 %v1016, %v1008
    %v1465 = vpack.c.b16 %v1017, %v1009
    %v1466 = vpack.c.b16 %v1018, %v1010
    %v1467 = vpack.c.b16 %v1019, %v1011
    %v1468 = vpack.c.b16 %v1020, %v1012
    %v1469 = vpack.c.b16 %v1021, %v1013
    %v1470 = vpack.c.b16 %v1030, %v1022
    %v1471 = vpack.c.b16 %v1031, %v1023
    %v1472 = vpack.c.b16 %v1032, %v1024
    %v1473 = vpack.c.b16 %v1033, %v1025
    %v1474 = vpack.c.b16 %v1034, %v1026
    %v1475 = vpack.c.b16 %v1035, %v1027
    %v1476 = vpack.c.b16 %v1036, %v1028
    %v1477 = vpack.c.b16 %v1037, %v1029
    %v1478 = vpack.c.b16 %v1046, %v1038
    %v1479 = vpack.c.b16 %v1047, %v1039
    %v1480 = vpack.c.b16 %v1048, %v1040
    %v1481 = vpack.c.b16 %v1049, %v1041
    %v1482 = vpack.c.b16 %v1050, %v1042
    %v1483 = vpack.c.b16 %v1051, %v1043
    %v1484 = vpack.c.b16 %v1052, %v1044
    %v1485 = vpack.c.b16 %v1053, %v1045
    %v1486 = vpack.c.b16 %v1062, %v1054
    %v1487 = vpack.c.b16 %v1063, %v1055
    %v1488 = vpack.c.b16 %v1064, %v1056
    %v1489 = vpack.c.b16 %v1065, %v1057
    %v1490 = vpack.c.b16 %v1066, %v1058
    %v1491 = vpack.c.b16 %v1067, %v1059
    %v1492 = vpack.c.b16 %v1068, %v1060
    %v1493 = vpack.c.b16 %v1069, %v1061
    %v1494 = vpack.c.b16 %v1078, %v1070
    %v1495 = vpack.c.b16 %v1079, %v1071
    %v1496 = vpack.c.b16 %v1080, %v1072
    %v1497 = vpack.c.b16 %v1081, %v1073
    %v1498 = vpack.c.b16 %v1082, %v1074
    %v1499 = vpack.c.b16 %v1083, %v1075
    %v1500 = vpack.c.b16 %v1084, %v1076
    %v1501 = vpack.c.b16 %v1085, %v1077
    %v1502 = vpack.c.b16 %v1094, %v1086
    %v1503 = vpack.c.b16 %v1095, %v1087
    %v1504 = vpack.c.b16 %v1096, %v1088
    %v1505 = vpack.c.b16 %v1097, %v1089
    %v1506 = vpack.c.b16 %v1098, %v1090
    %v1507 = vpack.c.b16 %v1099, %v1091
    %v1508 = vpack.c.b16 %v1100, %v1092
    %v1509 = vpack.c.b16 %v1101, %v1093
    %v1510 = vpack.c.b16 %v1110, %v1102
    %v1511 = vpack.c.b16 %v1111, %v1103
    %v1512 = vpack.c.b16 %v1112, %v1104
    %v1513 = vpack.c.b16 %v1113, %v1105
    %v1514 = vpack.c.b16 %v1114, %v1106
    %v1515 = vpack.c.b16 %v1115, %v1107
    %v1516 = vpack.c.b16 %v1116, %v1108
    %v1517 = vpack.c.b16 %v1117, %v1109
    %v1518 = vpack.c.b16 %v1126, %v1118
    %v1519 = vpack.c.b16 %v1127, %v1119
    %v1520 = vpack.c.b16 %v1128, %v1120
    %v1521 = vpack.c.b16 %v1129, %v1121
    %v1522 = vpack.c.b16 %v1130, %v1122
    %v1523 = vpack.c.b16 %v1131, %v1123
    %v1524 = vpack.c.b16 %v1132, %v1124
    %v1525 = vpack.c.b16 %v1133, %v1125
    %v1526 = vpack.c.b16 %v1142, %v1134
    %v1527 = vpack.c.b16 %v1143, %v1135
    %v1528 = vpack.c.b16 %v1144, %v1136
    %v1529 = vpack.c.b16 %v1145, %v1137
    %v1530 = vpack.c.b16 %v1146, %v1138
    %v1531 = vpack.c.b16 %v1147, %v1139
    %v1532 = vpack.c.b16 %v1148, %v1140
    %v1533 = vpack.c.b16 %v1149, %v1141
    %v1534 = vpack.c.b16 %v1158, %v1150
    %v1535 = vpack.c.b16 %v1159, %v1151
    %v1536 = vpack.c.b16 %v1160, %v1152
    %v1537 = vpack.c.b16 %v1161, %v1153
    %v1538 = vpack.c.b16 %v1162, %v1154
    %v1539 = vpack.c.b16 %v1163, %v1155
    %v1540 = vpack.c.b16 %v1164, %v1156
    %v1541 = vpack.c.b16 %v1165, %v1157
    %v1542 = vpack.c.b16 %v1174, %v1166
    %v1543 = vpack.c.b16 %v1175, %v1167
    %v1544 = vpack.c.b16 %v1176, %v1168
    %v1545 = vpack.c.b16 %v1177, %v1169
    %v1546 = vpack.c.b16 %v1178, %v1170
    %v1547 = vpack.c.b16 %v1179, %v1171
    %v1548 = vpack.c.b16 %v1180, %v1172
    %v1549 = vpack.c.b16 %v1181, %v1173
    %v1550 = vpack.c.b16 %v1190, %v1182
    %v1551 = vpack.c.b16 %v1191, %v1183
    %v1552 = vpack.c.b16 %v1192, %v1184
    %v1553 = vpack.c.b16 %v1193, %v1185
    %v1554 = vpack.c.b16 %v1194, %v1186
    %v1555 = vpack.c.b16 %v1195, %v1187
    %v1556 = vpack.c.b16 %v1196, %v1188
    %v1557 = vpack.c.b16 %v1197, %v1189
    %v1558 = vpack.c.b16 %v1206, %v1198
    %v1559 = vpack.c.b16 %v1207, %v1199
    %v1560 = vpack.c.b16 %v1208, %v1200
    %v1561 = vpack.c.b16 %v1209, %v1201
    %v1562 = vpack.c.b16 %v1210, %v1202
    %v1563 = vpack.c.b16 %v1211, %v1203
    %v1564 = vpack.c.b16 %v1212, %v1204
    %v1565 = vpack.c.b16 %v1213, %v1205
    %v1566 = vpack.c.b16 %v1222, %v1214
    %v1567 = vpack.c.b16 %v1223, %v1215
    %v1568 = vpack.c.b16 %v1224, %v1216
    %v1569 = vpack.c.b16 %v1225, %v1217
    %v1570 = vpack.c.b16 %v1226, %v1218
    %v1571 = vpack.c.b16 %v1227, %v1219
    %v1572 = vpack.c.b16 %v1228, %v1220
    %v1573 = vpack.c.b16 %v1229, %v1221
    %v1574 = vpack.c.b16 %v1238, %v1230
    %v1575 = vpack.c.b16 %v1239, %v1231
    %v1576 = vpack.c.b16 %v1240, %v1232
    %v1577 = vpack.c.b16 %v1241, %v1233
    %v1578 = vpack.c.b16 %v1242, %v1234
    %v1579 = vpack.c.b16 %v1243, %v1235
    %v1580 = vpack.c.b16 %v1244, %v1236
    %v1581 = vpack.c.b16 %v1245, %v1237
    %v1582 = vpack.c.b16 %v1254, %v1246
    %v1583 = vpack.c.b16 %v1255, %v1247
    %v1584 = vpack.c.b16 %v1256, %v1248
    %v1585 = vpack.c.b16 %v1257, %v1249
    %v1586 = vpack.c.b16 %v1258, %v1250
    %v1587 = vpack.c.b16 %v1259, %v1251
    %v1588 = vpack.c.b16 %v1260, %v1252
    %v1589 = vpack.c.b16 %v1261, %v1253
    %v1590 = vpack.c.b16 %v1270, %v1262
    %v1591 = vpack.c.b16 %v1271, %v1263
    %v1592 = vpack.c.b16 %v1272, %v1264
    %v1593 = vpack.c.b16 %v1273, %v1265
    %v1594 = vpack.c.b16 %v1274, %v1266
    %v1595 = vpack.c.b16 %v1275, %v1267
    %v1596 = vpack.c.b16 %v1276, %v1268
    %v1597 = vpack.c.b16 %v1277, %v1269
    %v1598 = vpack.c.b16 %v1286, %v1278
    %v1599 = vpack.c.b16 %v1287, %v1279
    %v1600 = vpack.c.b16 %v1288, %v1280
    %v1601 = vpack.c.b16 %v1289, %v1281
    %v1602 = vpack.c.b16 %v1290, %v1282
    %v1603 = vpack.c.b16 %v1291, %v1283
    %v1604 = vpack.c.b16 %v1292, %v1284
    %v1605 = vpack.c.b16 %v1293, %v1285
    %v1606 = vpack.c.b16 %v1302, %v1294
    %v1607 = vpack.c.b16 %v1303, %v1295
    %v1608 = vpack.c.b16 %v1304, %v1296
    %v1609 = vpack.c.b16 %v1305, %v1297
    %v1610 = vpack.c.b16 %v1306, %v1298
    %v1611 = vpack.c.b16 %v1307, %v1299
    %v1612 = vpack.c.b16 %v1308, %v1300
    %v1613 = vpack.c.b16 %v1309, %v1301
    %v1614 = vpack.c.b16 %v1318, %v1310
    %v1615 = vpack.c.b16 %v1319, %v1311
    %v1616 = vpack.c.b16 %v1320, %v1312
    %v1617 = vpack.c.b16 %v1321, %v1313
    %v1618 = vpack.c.b16 %v1322, %v1314
    %v1619 = vpack.c.b16 %v1323, %v1315
    %v1620 = vpack.c.b16 %v1324, %v1316
    %v1621 = vpack.c.b16 %v1325, %v1317
    %v1622 = vpack.c.b16 %v1334, %v1326
    %v1623 = vpack.c.b16 %v1335, %v1327
    %v1624 = vpack.c.b16 %v1336, %v1328
    %v1625 = vpack.c.b16 %v1337, %v1329
    %v1626 = vpack.c.b16 %v1338, %v1330
    %v1627 = vpack.c.b16 %v1339, %v1331
    %v1628 = vpack.c.b16 %v1340, %v1332
    %v1629 = vpack.c.b16 %v1341, %v1333
    %v1630 = vpack.c.b16 %v1350, %v1342
    %v1631 = vpack.c.b16 %v1351, %v1343
    %v1632 = vpack.c.b16 %v1352, %v1344
    %v1633 = vpack.c.b16 %v1353, %v1345
    %v1634 = vpack.c.b16 %v1354, %v1346
    %v1635 = vpack.c.b16 %v1355, %v1347
    %v1636 = vpack.c.b16 %v1356, %v1348
    %v1637 = vpack.c.b16 %v1357, %v1349
    %v1638 = vpack.c.b16 %v1366, %v1358
    %v1639 = vpack.c.b16 %v1367, %v1359
    %v1640 = vpack.c.b16 %v1368, %v1360
    %v1641 = vpack.c.b16 %v1369, %v1361
    %v1642 = vpack.c.b16 %v1370, %v1362
    %v1643 = vpack.c.b16 %v1371, %v1363
    %v1644 = vpack.c.b16 %v1372, %v1364
    %v1645 = vpack.c.b16 %v1373, %v1365
    %v1646 = vpack.c.b16 %v1382, %v1374
    %v1647 = vpack.c.b16 %v1383, %v1375
    %v1648 = vpack.c.b16 %v1384, %v1376
    %v1649 = vpack.c.b16 %v1385, %v1377
    %v1650 = vpack.c.b16 %v1386, %v1378
    %v1651 = vpack.c.b16 %v1387, %v1379
    %v1652 = vpack.c.b16 %v1388, %v1380
    %v1653 = vpack.c.b16 %v1389, %v1381
    %v1654 = vpack.c.b16 %v1398, %v1390
    %v1655 = vpack.c.b16 %v1399, %v1391
    %v1656 = vpack.c.b16 %v1400, %v1392
    %v1657 = vpack.c.b16 %v1401, %v1393
    %v1658 = vpack.c.b16 %v1402, %v1394
    %v1659 = vpack.c.b16 %v1403, %v1395
    %v1660 = vpack.c.b16 %v1404, %v1396
    %v1661 = vpack.c.b16 %v1405, %v1397
    %1918 = vmatprep.subr.bf16.mxu0 %v1407
    %1919 = vmatpush1.bf16.msra.mxu0 %v1406
    %1920 = vmatprep.subr.bf16.mxu0 %v1415
    %1921 = vmatpush1.bf16.msra.mxu0 %v1414
    %1922 = vmatprep.subr.bf16.mxu0 %v1423
    %1923 = vmatpush1.bf16.msra.mxu0 %v1422
    %1924 = vmatprep.subr.bf16.mxu0 %v1431
    %1925 = vmatpush1.bf16.msra.mxu0 %v1430
    %1926 = vmatprep.subr.bf16.mxu0 %v1439
    %1927 = vmatpush1.bf16.msra.mxu0 %v1438
    %1928 = vmatprep.subr.bf16.mxu0 %v1447
    %1929 = vmatpush1.bf16.msra.mxu0 %v1446
    %1930 = vmatprep.subr.bf16.mxu0 %v1455
    %1931 = vmatpush1.bf16.msra.mxu0 %v1454
    %1932 = vmatprep.subr.bf16.mxu0 %v1463
    %1933 = vmatpush1.bf16.msra.mxu0 %v1462
    %1934 = vmatprep.subr.bf16.mxu0 %v1471
    %1935 = vmatpush1.bf16.msra.mxu0 %v1470
    %1936 = vmatprep.subr.bf16.mxu0 %v1479
    %1937 = vmatpush1.bf16.msra.mxu0 %v1478
    %1938 = vmatprep.subr.bf16.mxu0 %v1487
    %1939 = vmatpush1.bf16.msra.mxu0 %v1486
    %1940 = vmatprep.subr.bf16.mxu0 %v1495
    %1941 = vmatpush1.bf16.msra.mxu0 %v1494
    %1942 = vmatprep.subr.bf16.mxu0 %v1503
    %1943 = vmatpush1.bf16.msra.mxu0 %v1502
    %1944 = vmatprep.subr.bf16.mxu0 %v1511
    %1945 = vmatpush1.bf16.msra.mxu0 %v1510
    %1946 = vmatprep.subr.bf16.mxu0 %v1519
    %1947 = vmatpush1.bf16.msra.mxu0 %v1518
    %1948 = vmatprep.subr.bf16.mxu0 %v1527
    %1949 = vmatpush1.bf16.msra.mxu0 %v1526
    %1950 = vmatprep.mubr.bf16.mxu0 %v337
    %1951 = vmatmul.mubr.bf16.gmra.mrb[0].mxu0 %v336
    %v1952 = vpop.f32.mrb[0].mxu0
    %v1953 = vadd.f32 %v601, %v1952
    %v1954 = vpop.f32.mrb[0].mxu0
    %v1955 = vadd.f32 %v605, %v1954
    %v1956 = vpop.f32.mrb[0].mxu0
    %v1957 = vpop.f32.mrb[0].mxu0
    %1958 = vdwg.mxu0
    %1959 = vmatprep.subr.bf16.mxu0 %v1535
    %1960 = vmatpush1.bf16.msra.mxu0 %v1534
    %1961 = vmatprep.subr.bf16.mxu0 %v1543
    %1962 = vmatpush1.bf16.msra.mxu0 %v1542
    %1963 = vmatprep.subr.bf16.mxu0 %v1551
    %1964 = vmatpush1.bf16.msra.mxu0 %v1550
    %1965 = vmatprep.subr.bf16.mxu0 %v1559
    %1966 = vmatpush1.bf16.msra.mxu0 %v1558
    %1967 = vmatprep.subr.bf16.mxu0 %v1567
    %1968 = vmatpush1.bf16.msra.mxu0 %v1566
    %1969 = vmatprep.subr.bf16.mxu0 %v1575
    %1970 = vmatpush1.bf16.msra.mxu0 %v1574
    %1971 = vmatprep.subr.bf16.mxu0 %v1583
    %1972 = vmatpush1.bf16.msra.mxu0 %v1582
    %1973 = vmatprep.subr.bf16.mxu0 %v1591
    %1974 = vmatpush1.bf16.msra.mxu0 %v1590
    %1975 = vmatprep.subr.bf16.mxu0 %v1599
    %1976 = vmatpush1.bf16.msra.mxu0 %v1598
    %1977 = vmatprep.subr.bf16.mxu0 %v1607
    %1978 = vmatpush1.bf16.msra.mxu0 %v1606
    %1979 = vmatprep.subr.bf16.mxu0 %v1615
    %1980 = vmatpush1.bf16.msra.mxu0 %v1614
    %1981 = vmatprep.subr.bf16.mxu0 %v1623
    %1982 = vmatpush1.bf16.msra.mxu0 %v1622
    %1983 = vmatprep.subr.bf16.mxu0 %v1631
    %1984 = vmatpush1.bf16.msra.mxu0 %v1630
    %1985 = vmatprep.subr.bf16.mxu0 %v1639
    %1986 = vmatpush1.bf16.msra.mxu0 %v1638
    %1987 = vmatprep.subr.bf16.mxu0 %v1647
    %1988 = vmatpush1.bf16.msra.mxu0 %v1646
    %1989 = vmatprep.subr.bf16.mxu0 %v1655
    %1990 = vmatpush1.bf16.msra.mxu0 %v1654
    %1991 = vmatprep.mubr.bf16.mxu0 %v339
    %1992 = vmatmul.mubr.bf16.gmra.mrb[0].mxu0 %v338
    %v1993 = vpop.f32.mrb[0].mxu0
    %v1994 = vadd.f32 %v1953, %v1993
    %v1995 = vpop.f32.mrb[0].mxu0
    %v1996 = vadd.f32 %v1955, %v1995
    %v1997 = vpop.f32.mrb[0].mxu0
    %v1998 = vpop.f32.mrb[0].mxu0
    %1999 = vdwg.mxu0
    %2000 = vmatprep.subr.bf16.mxu0 %v1409
    %2001 = vmatpush1.bf16.msra.mxu0 %v1408
    %2002 = vmatprep.subr.bf16.mxu0 %v1417
    %2003 = vmatpush1.bf16.msra.mxu0 %v1416
    %2004 = vmatprep.subr.bf16.mxu0 %v1425
    %2005 = vmatpush1.bf16.msra.mxu0 %v1424
    %2006 = vmatprep.subr.bf16.mxu0 %v1433
    %2007 = vmatpush1.bf16.msra.mxu0 %v1432
    %2008 = vmatprep.subr.bf16.mxu0 %v1441
    %2009 = vmatpush1.bf16.msra.mxu0 %v1440
    %2010 = vmatprep.subr.bf16.mxu0 %v1449
    %2011 = vmatpush1.bf16.msra.mxu0 %v1448
    %2012 = vmatprep.subr.bf16.mxu0 %v1457
    %2013 = vmatpush1.bf16.msra.mxu0 %v1456
    %2014 = vmatprep.subr.bf16.mxu0 %v1465
    %2015 = vmatpush1.bf16.msra.mxu0 %v1464
    %2016 = vmatprep.subr.bf16.mxu0 %v1473
    %2017 = vmatpush1.bf16.msra.mxu0 %v1472
    %2018 = vmatprep.subr.bf16.mxu0 %v1481
    %2019 = vmatpush1.bf16.msra.mxu0 %v1480
    %2020 = vmatprep.subr.bf16.mxu0 %v1489
    %2021 = vmatpush1.bf16.msra.mxu0 %v1488
    %2022 = vmatprep.subr.bf16.mxu0 %v1497
    %2023 = vmatpush1.bf16.msra.mxu0 %v1496
    %2024 = vmatprep.subr.bf16.mxu0 %v1505
    %2025 = vmatpush1.bf16.msra.mxu0 %v1504
    %2026 = vmatprep.subr.bf16.mxu0 %v1513
    %2027 = vmatpush1.bf16.msra.mxu0 %v1512
    %2028 = vmatprep.subr.bf16.mxu0 %v1521
    %2029 = vmatpush1.bf16.msra.mxu0 %v1520
    %2030 = vmatprep.subr.bf16.mxu0 %v1529
    %2031 = vmatpush1.bf16.msra.mxu0 %v1528
    %2032 = vmatprep.mubr.bf16.mxu0 %v337
    %2033 = vmatmul.mubr.bf16.gmra.mrb[0].mxu0 %v336
    %v2034 = vpop.f32.mrb[0].mxu0
    %v2035 = vadd.f32 %v609, %v2034
    %v2036 = vpop.f32.mrb[0].mxu0
    %v2037 = vadd.f32 %v613, %v2036
    %v2038 = vpop.f32.mrb[0].mxu0
    %v2039 = vpop.f32.mrb[0].mxu0
    %2040 = vdwg.mxu0
    %2041 = vmatprep.subr.bf16.mxu0 %v1537
    %2042 = vmatpush1.bf16.msra.mxu0 %v1536
    %2043 = vmatprep.subr.bf16.mxu0 %v1545
    %2044 = vmatpush1.bf16.msra.mxu0 %v1544
    %2045 = vmatprep.subr.bf16.mxu0 %v1553
    %2046 = vmatpush1.bf16.msra.mxu0 %v1552
    %2047 = vmatprep.subr.bf16.mxu0 %v1561
    %2048 = vmatpush1.bf16.msra.mxu0 %v1560
    %2049 = vmatprep.subr.bf16.mxu0 %v1569
    %2050 = vmatpush1.bf16.msra.mxu0 %v1568
    %2051 = vmatprep.subr.bf16.mxu0 %v1577
    %2052 = vmatpush1.bf16.msra.mxu0 %v1576
    %2053 = vmatprep.subr.bf16.mxu0 %v1585
    %2054 = vmatpush1.bf16.msra.mxu0 %v1584
    %2055 = vmatprep.subr.bf16.mxu0 %v1593
    %2056 = vmatpush1.bf16.msra.mxu0 %v1592
    %2057 = vmatprep.subr.bf16.mxu0 %v1601
    %2058 = vmatpush1.bf16.msra.mxu0 %v1600
    %2059 = vmatprep.subr.bf16.mxu0 %v1609
    %2060 = vmatpush1.bf16.msra.mxu0 %v1608
    %2061 = vmatprep.subr.bf16.mxu0 %v1617
    %2062 = vmatpush1.bf16.msra.mxu0 %v1616
    %2063 = vmatprep.subr.bf16.mxu0 %v1625
    %2064 = vmatpush1.bf16.msra.mxu0 %v1624
    %2065 = vmatprep.subr.bf16.mxu0 %v1633
    %2066 = vmatpush1.bf16.msra.mxu0 %v1632
    %2067 = vmatprep.subr.bf16.mxu0 %v1641
    %2068 = vmatpush1.bf16.msra.mxu0 %v1640
    %2069 = vmatprep.subr.bf16.mxu0 %v1649
    %2070 = vmatpush1.bf16.msra.mxu0 %v1648
    %2071 = vmatprep.subr.bf16.mxu0 %v1657
    %2072 = vmatpush1.bf16.msra.mxu0 %v1656
    %2073 = vmatprep.mubr.bf16.mxu0 %v339
    %2074 = vmatmul.mubr.bf16.gmra.mrb[0].mxu0 %v338
    %v2075 = vpop.f32.mrb[0].mxu0
    %v2076 = vadd.f32 %v2035, %v2075
    %v2077 = vpop.f32.mrb[0].mxu0
    %v2078 = vadd.f32 %v2037, %v2077
    %v2079 = vpop.f32.mrb[0].mxu0
    %v2080 = vpop.f32.mrb[0].mxu0
    %2081 = vdwg.mxu0
    %2082 = vmatprep.subr.bf16.mxu0 %v1411
    %2083 = vmatpush1.bf16.msra.mxu0 %v1410
    %2084 = vmatprep.subr.bf16.mxu0 %v1419
    %2085 = vmatpush1.bf16.msra.mxu0 %v1418
    %2086 = vmatprep.subr.bf16.mxu0 %v1427
    %2087 = vmatpush1.bf16.msra.mxu0 %v1426
    %2088 = vmatprep.subr.bf16.mxu0 %v1435
    %2089 = vmatpush1.bf16.msra.mxu0 %v1434
    %2090 = vmatprep.subr.bf16.mxu0 %v1443
    %2091 = vmatpush1.bf16.msra.mxu0 %v1442
    %2092 = vmatprep.subr.bf16.mxu0 %v1451
    %2093 = vmatpush1.bf16.msra.mxu0 %v1450
    %2094 = vmatprep.subr.bf16.mxu0 %v1459
    %2095 = vmatpush1.bf16.msra.mxu0 %v1458
    %2096 = vmatprep.subr.bf16.mxu0 %v1467
    %2097 = vmatpush1.bf16.msra.mxu0 %v1466
    %2098 = vmatprep.subr.bf16.mxu0 %v1475
    %2099 = vmatpush1.bf16.msra.mxu0 %v1474
    %2100 = vmatprep.subr.bf16.mxu0 %v1483
    %2101 = vmatpush1.bf16.msra.mxu0 %v1482
    %2102 = vmatprep.subr.bf16.mxu0 %v1491
    %2103 = vmatpush1.bf16.msra.mxu0 %v1490
    %2104 = vmatprep.subr.bf16.mxu0 %v1499
    %2105 = vmatpush1.bf16.msra.mxu0 %v1498
    %2106 = vmatprep.subr.bf16.mxu0 %v1507
    %2107 = vmatpush1.bf16.msra.mxu0 %v1506
    %2108 = vmatprep.subr.bf16.mxu0 %v1515
    %2109 = vmatpush1.bf16.msra.mxu0 %v1514
    %2110 = vmatprep.subr.bf16.mxu0 %v1523
    %2111 = vmatpush1.bf16.msra.mxu0 %v1522
    %2112 = vmatprep.subr.bf16.mxu0 %v1531
    %2113 = vmatpush1.bf16.msra.mxu0 %v1530
    %2114 = vmatprep.mubr.bf16.mxu0 %v337
    %2115 = vmatmul.mubr.bf16.gmra.mrb[0].mxu0 %v336
    %v2116 = vpop.f32.mrb[0].mxu0
    %v2117 = vadd.f32 %v617, %v2116
    %v2118 = vpop.f32.mrb[0].mxu0
    %v2119 = vadd.f32 %v621, %v2118
    %v2120 = vpop.f32.mrb[0].mxu0
    %v2121 = vpop.f32.mrb[0].mxu0
    %2122 = vdwg.mxu0
    %2123 = vmatprep.subr.bf16.mxu0 %v1539
    %2124 = vmatpush1.bf16.msra.mxu0 %v1538
    %2125 = vmatprep.subr.bf16.mxu0 %v1547
    %2126 = vmatpush1.bf16.msra.mxu0 %v1546
    %2127 = vmatprep.subr.bf16.mxu0 %v1555
    %2128 = vmatpush1.bf16.msra.mxu0 %v1554
    %2129 = vmatprep.subr.bf16.mxu0 %v1563
    %2130 = vmatpush1.bf16.msra.mxu0 %v1562
    %2131 = vmatprep.subr.bf16.mxu0 %v1571
    %2132 = vmatpush1.bf16.msra.mxu0 %v1570
    %2133 = vmatprep.subr.bf16.mxu0 %v1579
    %2134 = vmatpush1.bf16.msra.mxu0 %v1578
    %2135 = vmatprep.subr.bf16.mxu0 %v1587
    %2136 = vmatpush1.bf16.msra.mxu0 %v1586
    %2137 = vmatprep.subr.bf16.mxu0 %v1595
    %2138 = vmatpush1.bf16.msra.mxu0 %v1594
    %2139 = vmatprep.subr.bf16.mxu0 %v1603
    %2140 = vmatpush1.bf16.msra.mxu0 %v1602
    %2141 = vmatprep.subr.bf16.mxu0 %v1611
    %2142 = vmatpush1.bf16.msra.mxu0 %v1610
    %2143 = vmatprep.subr.bf16.mxu0 %v1619
    %2144 = vmatpush1.bf16.msra.mxu0 %v1618
    %2145 = vmatprep.subr.bf16.mxu0 %v1627
    %2146 = vmatpush1.bf16.msra.mxu0 %v1626
    %2147 = vmatprep.subr.bf16.mxu0 %v1635
    %2148 = vmatpush1.bf16.msra.mxu0 %v1634
    %2149 = vmatprep.subr.bf16.mxu0 %v1643
    %2150 = vmatpush1.bf16.msra.mxu0 %v1642
    %2151 = vmatprep.subr.bf16.mxu0 %v1651
    %2152 = vmatpush1.bf16.msra.mxu0 %v1650
    %2153 = vmatprep.subr.bf16.mxu0 %v1659
    %2154 = vmatpush1.bf16.msra.mxu0 %v1658
    %2155 = vmatprep.mubr.bf16.mxu0 %v339
    %2156 = vmatmul.mubr.bf16.gmra.mrb[0].mxu0 %v338
    %v2157 = vpop.f32.mrb[0].mxu0
    %v2158 = vadd.f32 %v2117, %v2157
    %v2159 = vpop.f32.mrb[0].mxu0
    %v2160 = vadd.f32 %v2119, %v2159
    %v2161 = vpop.f32.mrb[0].mxu0
    %v2162 = vpop.f32.mrb[0].mxu0
    %2163 = vdwg.mxu0
    %2164 = vmatprep.subr.bf16.mxu0 %v1413
    %2165 = vmatpush1.bf16.msra.mxu0 %v1412
    %2166 = vmatprep.subr.bf16.mxu0 %v1421
    %2167 = vmatpush1.bf16.msra.mxu0 %v1420
    %2168 = vmatprep.subr.bf16.mxu0 %v1429
    %2169 = vmatpush1.bf16.msra.mxu0 %v1428
    %2170 = vmatprep.subr.bf16.mxu0 %v1437
    %2171 = vmatpush1.bf16.msra.mxu0 %v1436
    %2172 = vmatprep.subr.bf16.mxu0 %v1445
    %2173 = vmatpush1.bf16.msra.mxu0 %v1444
    %2174 = vmatprep.subr.bf16.mxu0 %v1453
    %2175 = vmatpush1.bf16.msra.mxu0 %v1452
    %2176 = vmatprep.subr.bf16.mxu0 %v1461
    %2177 = vmatpush1.bf16.msra.mxu0 %v1460
    %2178 = vmatprep.subr.bf16.mxu0 %v1469
    %2179 = vmatpush1.bf16.msra.mxu0 %v1468
    %2180 = vmatprep.subr.bf16.mxu0 %v1477
    %2181 = vmatpush1.bf16.msra.mxu0 %v1476
    %2182 = vmatprep.subr.bf16.mxu0 %v1485
    %2183 = vmatpush1.bf16.msra.mxu0 %v1484
    %2184 = vmatprep.subr.bf16.mxu0 %v1493
    %2185 = vmatpush1.bf16.msra.mxu0 %v1492
    %2186 = vmatprep.subr.bf16.mxu0 %v1501
    %2187 = vmatpush1.bf16.msra.mxu0 %v1500
    %2188 = vmatprep.subr.bf16.mxu0 %v1509
    %2189 = vmatpush1.bf16.msra.mxu0 %v1508
    %2190 = vmatprep.subr.bf16.mxu0 %v1517
    %2191 = vmatpush1.bf16.msra.mxu0 %v1516
    %2192 = vmatprep.subr.bf16.mxu0 %v1525
    %2193 = vmatpush1.bf16.msra.mxu0 %v1524
    %2194 = vmatprep.subr.bf16.mxu0 %v1533
    %2195 = vmatpush1.bf16.msra.mxu0 %v1532
    %2196 = vmatprep.mubr.bf16.mxu0 %v337
    %2197 = vmatmul.mubr.bf16.gmra.mrb[0].mxu0 %v336
    %v2198 = vpop.f32.mrb[0].mxu0
    %v2199 = vadd.f32 %v625, %v2198
    %v2200 = vpop.f32.mrb[0].mxu0
    %v2201 = vadd.f32 %v629, %v2200
    %v2202 = vpop.f32.mrb[0].mxu0
    %v2203 = vpop.f32.mrb[0].mxu0
    %2204 = vdwg.mxu0
    %2205 = vmatprep.subr.bf16.mxu0 %v1541
    %2206 = vmatpush1.bf16.msra.mxu0 %v1540
    %2207 = vmatprep.subr.bf16.mxu0 %v1549
    %2208 = vmatpush1.bf16.msra.mxu0 %v1548
    %2209 = vmatprep.subr.bf16.mxu0 %v1557
    %2210 = vmatpush1.bf16.msra.mxu0 %v1556
    %2211 = vmatprep.subr.bf16.mxu0 %v1565
    %2212 = vmatpush1.bf16.msra.mxu0 %v1564
    %2213 = vmatprep.subr.bf16.mxu0 %v1573
    %2214 = vmatpush1.bf16.msra.mxu0 %v1572
    %2215 = vmatprep.subr.bf16.mxu0 %v1581
    %2216 = vmatpush1.bf16.msra.mxu0 %v1580
    %2217 = vmatprep.subr.bf16.mxu0 %v1589
    %2218 = vmatpush1.bf16.msra.mxu0 %v1588
    %2219 = vmatprep.subr.bf16.mxu0 %v1597
    %2220 = vmatpush1.bf16.msra.mxu0 %v1596
    %2221 = vmatprep.subr.bf16.mxu0 %v1605
    %2222 = vmatpush1.bf16.msra.mxu0 %v1604
    %2223 = vmatprep.subr.bf16.mxu0 %v1613
    %2224 = vmatpush1.bf16.msra.mxu0 %v1612
    %2225 = vmatprep.subr.bf16.mxu0 %v1621
    %2226 = vmatpush1.bf16.msra.mxu0 %v1620
    %2227 = vmatprep.subr.bf16.mxu0 %v1629
    %2228 = vmatpush1.bf16.msra.mxu0 %v1628
    %2229 = vmatprep.subr.bf16.mxu0 %v1637
    %2230 = vmatpush1.bf16.msra.mxu0 %v1636
    %2231 = vmatprep.subr.bf16.mxu0 %v1645
    %2232 = vmatpush1.bf16.msra.mxu0 %v1644
    %2233 = vmatprep.subr.bf16.mxu0 %v1653
    %2234 = vmatpush1.bf16.msra.mxu0 %v1652
    %2235 = vmatprep.subr.bf16.mxu0 %v1661
    %2236 = vmatpush1.bf16.msra.mxu0 %v1660
    %2237 = vmatprep.mubr.bf16.mxu0 %v339
    %2238 = vmatmul.mubr.bf16.gmra.mrb[0].mxu0 %v338
    %v2239 = vpop.f32.mrb[0].mxu0
    %v2240 = vadd.f32 %v2199, %v2239
    %v2241 = vpop.f32.mrb[0].mxu0
    %v2242 = vadd.f32 %v2201, %v2241
    %v2243 = vpop.f32.mrb[0].mxu0
    %v2244 = vpop.f32.mrb[0].mxu0
    %2245 = vdwg.mxu0
    %v2246 = vmax.f32 %v1994, 0.0
    %v2247 = vmax.f32 %v1996, 0.0
    %v2248 = vmax.f32 %v2076, 0.0
    %v2249 = vmax.f32 %v2078, 0.0
    %v2250 = vmax.f32 %v2158, 0.0
    %v2251 = vmax.f32 %v2160, 0.0
    %v2252 = vmax.f32 %v2240, 0.0
    %v2253 = vmax.f32 %v2242, 0.0
    %v2254 = vpack.c.bf16 %v2246, %v2246
    %v2255 = vpack.c.bf16 %v2247, %v2247
    %v2256 = vpack.c.bf16 %v2248, %v2248
    %v2257 = vpack.c.bf16 %v2249, %v2249
    %v2258 = vpack.c.bf16 %v2250, %v2250
    %v2259 = vpack.c.bf16 %v2251, %v2251
    %v2260 = vpack.c.bf16 %v2252, %v2252
    %v2261 = vpack.c.bf16 %v2253, %v2253
    %v2262 = vld [vmem:[#allocation8] sm:$0xff]
    %v2263 = vld [vmem:[#allocation8 + $0x8] sm:$0xff]
    %v2264 = vld [vmem:[#allocation8 + $0x10] sm:$0xff]
    %v2265 = vld [vmem:[#allocation8 + $0x18] sm:$0xff]
    %v2266 = vld [vmem:[#allocation8 + $0x20] sm:$0xff]
    %v2267 = vld [vmem:[#allocation8 + $0x28] sm:$0xff]
    %v2268 = vld [vmem:[#allocation8 + $0x30] sm:$0xff]
    %v2269 = vld [vmem:[#allocation8 + $0x38] sm:$0xff]
    %v2270 = vld [vmem:[#allocation8 + $0x40] sm:$0xff]
    %v2271 = vld [vmem:[#allocation8 + $0x48] sm:$0xff]
    %v2272 = vld [vmem:[#allocation8 + $0x50] sm:$0xff]
    %v2273 = vld [vmem:[#allocation8 + $0x58] sm:$0xff]
    %v2274 = vld [vmem:[#allocation8 + $0x60] sm:$0xff]
    %v2275 = vld [vmem:[#allocation8 + $0x68] sm:$0xff]
    %v2276 = vld [vmem:[#allocation8 + $0x70] sm:$0xff]
    %v2277 = vld [vmem:[#allocation8 + $0x78] sm:$0xff]
    %v2278 = vld [vmem:[#allocation8 + $0x80] sm:$0xff]
    %v2279 = vld [vmem:[#allocation8 + $0x88] sm:$0xff]
    %v2280 = vld [vmem:[#allocation8 + $0x90] sm:$0xff]
    %v2281 = vld [vmem:[#allocation8 + $0x98] sm:$0xff]
    %v2282 = vld [vmem:[#allocation8 + $0xa0] sm:$0xff]
    %v2283 = vld [vmem:[#allocation8 + $0xa8] sm:$0xff]
    %v2284 = vld [vmem:[#allocation8 + $0xb0] sm:$0xff]
    %v2285 = vld [vmem:[#allocation8 + $0xb8] sm:$0xff]
    %v2286 = vld [vmem:[#allocation8 + $0xc0] sm:$0xff]
    %v2287 = vld [vmem:[#allocation8 + $0xc8] sm:$0xff]
    %v2288 = vld [vmem:[#allocation8 + $0xd0] sm:$0xff]
    %v2289 = vld [vmem:[#allocation8 + $0xd8] sm:$0xff]
    %v2290 = vld [vmem:[#allocation8 + $0xe0] sm:$0xff]
    %v2291 = vld [vmem:[#allocation8 + $0xe8] sm:$0xff]
    %v2292 = vld [vmem:[#allocation8 + $0xf0] sm:$0xff]
    %v2293 = vld [vmem:[#allocation8 + $0xf8] sm:$0xff]
    %v2294 = vld [vmem:[#allocation8 + $0x100] sm:$0xff]
    %v2295 = vld [vmem:[#allocation8 + $0x108] sm:$0xff]
    %v2296 = vld [vmem:[#allocation8 + $0x110] sm:$0xff]
    %v2297 = vld [vmem:[#allocation8 + $0x118] sm:$0xff]
    %v2298 = vld [vmem:[#allocation8 + $0x120] sm:$0xff]
    %v2299 = vld [vmem:[#allocation8 + $0x128] sm:$0xff]
    %v2300 = vld [vmem:[#allocation8 + $0x130] sm:$0xff]
    %v2301 = vld [vmem:[#allocation8 + $0x138] sm:$0xff]
    %v2302 = vld [vmem:[#allocation8 + $0x140] sm:$0xff]
    %v2303 = vld [vmem:[#allocation8 + $0x148] sm:$0xff]
    %v2304 = vld [vmem:[#allocation8 + $0x150] sm:$0xff]
    %v2305 = vld [vmem:[#allocation8 + $0x158] sm:$0xff]
    %v2306 = vld [vmem:[#allocation8 + $0x160] sm:$0xff]
    %v2307 = vld [vmem:[#allocation8 + $0x168] sm:$0xff]
    %v2308 = vld [vmem:[#allocation8 + $0x170] sm:$0xff]
    %v2309 = vld [vmem:[#allocation8 + $0x178] sm:$0xff]
    %v2310 = vld [vmem:[#allocation8 + $0x180] sm:$0xff]
    %v2311 = vld [vmem:[#allocation8 + $0x188] sm:$0xff]
    %v2312 = vld [vmem:[#allocation8 + $0x190] sm:$0xff]
    %v2313 = vld [vmem:[#allocation8 + $0x198] sm:$0xff]
    %v2314 = vld [vmem:[#allocation8 + $0x1a0] sm:$0xff]
    %v2315 = vld [vmem:[#allocation8 + $0x1a8] sm:$0xff]
    %v2316 = vld [vmem:[#allocation8 + $0x1b0] sm:$0xff]
    %v2317 = vld [vmem:[#allocation8 + $0x1b8] sm:$0xff]
    %v2318 = vld [vmem:[#allocation8 + $0x1c0] sm:$0xff]
    %v2319 = vld [vmem:[#allocation8 + $0x1c8] sm:$0xff]
    %v2320 = vld [vmem:[#allocation8 + $0x1d0] sm:$0xff]
    %v2321 = vld [vmem:[#allocation8 + $0x1d8] sm:$0xff]
    %v2322 = vld [vmem:[#allocation8 + $0x1e0] sm:$0xff]
    %v2323 = vld [vmem:[#allocation8 + $0x1e8] sm:$0xff]
    %v2324 = vld [vmem:[#allocation8 + $0x1f0] sm:$0xff]
    %v2325 = vld [vmem:[#allocation8 + $0x1f8] sm:$0xff]
    %v2326 = vld [vmem:[#allocation8 + $0x200] sm:$0xff]
    %v2327 = vld [vmem:[#allocation8 + $0x208] sm:$0xff]
    %v2328 = vld [vmem:[#allocation8 + $0x210] sm:$0xff]
    %v2329 = vld [vmem:[#allocation8 + $0x218] sm:$0xff]
    %v2330 = vld [vmem:[#allocation8 + $0x220] sm:$0xff]
    %v2331 = vld [vmem:[#allocation8 + $0x228] sm:$0xff]
    %v2332 = vld [vmem:[#allocation8 + $0x230] sm:$0xff]
    %v2333 = vld [vmem:[#allocation8 + $0x238] sm:$0xff]
    %v2334 = vld [vmem:[#allocation8 + $0x240] sm:$0xff]
    %v2335 = vld [vmem:[#allocation8 + $0x248] sm:$0xff]
    %v2336 = vld [vmem:[#allocation8 + $0x250] sm:$0xff]
    %v2337 = vld [vmem:[#allocation8 + $0x258] sm:$0xff]
    %v2338 = vld [vmem:[#allocation8 + $0x260] sm:$0xff]
    %v2339 = vld [vmem:[#allocation8 + $0x268] sm:$0xff]
    %v2340 = vld [vmem:[#allocation8 + $0x270] sm:$0xff]
    %v2341 = vld [vmem:[#allocation8 + $0x278] sm:$0xff]
    %v2342 = vld [vmem:[#allocation8 + $0x280] sm:$0xff]
    %v2343 = vld [vmem:[#allocation8 + $0x288] sm:$0xff]
    %v2344 = vld [vmem:[#allocation8 + $0x290] sm:$0xff]
    %v2345 = vld [vmem:[#allocation8 + $0x298] sm:$0xff]
    %v2346 = vld [vmem:[#allocation8 + $0x2a0] sm:$0xff]
    %v2347 = vld [vmem:[#allocation8 + $0x2a8] sm:$0xff]
    %v2348 = vld [vmem:[#allocation8 + $0x2b0] sm:$0xff]
    %v2349 = vld [vmem:[#allocation8 + $0x2b8] sm:$0xff]
    %v2350 = vld [vmem:[#allocation8 + $0x2c0] sm:$0xff]
    %v2351 = vld [vmem:[#allocation8 + $0x2c8] sm:$0xff]
    %v2352 = vld [vmem:[#allocation8 + $0x2d0] sm:$0xff]
    %v2353 = vld [vmem:[#allocation8 + $0x2d8] sm:$0xff]
    %v2354 = vld [vmem:[#allocation8 + $0x2e0] sm:$0xff]
    %v2355 = vld [vmem:[#allocation8 + $0x2e8] sm:$0xff]
    %v2356 = vld [vmem:[#allocation8 + $0x2f0] sm:$0xff]
    %v2357 = vld [vmem:[#allocation8 + $0x2f8] sm:$0xff]
    %v2358 = vld [vmem:[#allocation8 + $0x300] sm:$0xff]
    %v2359 = vld [vmem:[#allocation8 + $0x308] sm:$0xff]
    %v2360 = vld [vmem:[#allocation8 + $0x310] sm:$0xff]
    %v2361 = vld [vmem:[#allocation8 + $0x318] sm:$0xff]
    %v2362 = vld [vmem:[#allocation8 + $0x320] sm:$0xff]
    %v2363 = vld [vmem:[#allocation8 + $0x328] sm:$0xff]
    %v2364 = vld [vmem:[#allocation8 + $0x330] sm:$0xff]
    %v2365 = vld [vmem:[#allocation8 + $0x338] sm:$0xff]
    %v2366 = vld [vmem:[#allocation8 + $0x340] sm:$0xff]
    %v2367 = vld [vmem:[#allocation8 + $0x348] sm:$0xff]
    %v2368 = vld [vmem:[#allocation8 + $0x350] sm:$0xff]
    %v2369 = vld [vmem:[#allocation8 + $0x358] sm:$0xff]
    %v2370 = vld [vmem:[#allocation8 + $0x360] sm:$0xff]
    %v2371 = vld [vmem:[#allocation8 + $0x368] sm:$0xff]
    %v2372 = vld [vmem:[#allocation8 + $0x370] sm:$0xff]
    %v2373 = vld [vmem:[#allocation8 + $0x378] sm:$0xff]
    %v2374 = vld [vmem:[#allocation8 + $0x380] sm:$0xff]
    %v2375 = vld [vmem:[#allocation8 + $0x388] sm:$0xff]
    %v2376 = vld [vmem:[#allocation8 + $0x390] sm:$0xff]
    %v2377 = vld [vmem:[#allocation8 + $0x398] sm:$0xff]
    %v2378 = vld [vmem:[#allocation8 + $0x3a0] sm:$0xff]
    %v2379 = vld [vmem:[#allocation8 + $0x3a8] sm:$0xff]
    %v2380 = vld [vmem:[#allocation8 + $0x3b0] sm:$0xff]
    %v2381 = vld [vmem:[#allocation8 + $0x3b8] sm:$0xff]
    %v2382 = vld [vmem:[#allocation8 + $0x3c0] sm:$0xff]
    %v2383 = vld [vmem:[#allocation8 + $0x3c8] sm:$0xff]
    %v2384 = vld [vmem:[#allocation8 + $0x3d0] sm:$0xff]
    %v2385 = vld [vmem:[#allocation8 + $0x3d8] sm:$0xff]
    %v2386 = vld [vmem:[#allocation8 + $0x3e0] sm:$0xff]
    %v2387 = vld [vmem:[#allocation8 + $0x3e8] sm:$0xff]
    %v2388 = vld [vmem:[#allocation8 + $0x3f0] sm:$0xff]
    %v2389 = vld [vmem:[#allocation8 + $0x3f8] sm:$0xff]
    %v2390 = vld [vmem:[%s7] sm:$0x3]
    %v2392 = vlaneseq
    %v2393 = vshrl.u32 %v2392, 7
    %v2394 = vsub.s32 0, %v2393
    %v2395 = vrot.slane %v2390, %v2394
    %v2396 = vlaneseq
    %v2397 = vshrl.u32 %v2396, 7
    %v2398 = vsub.s32 1, %v2397
    %v2399 = vrot.slane %v2390, %v2398
    %v2530 = vunpack.c.l.b16 %v2262
    %v2531 = vunpack.c.h.b16 %v2262
    %v2532 = vunpack.c.l.b16 %v2263
    %v2533 = vunpack.c.h.b16 %v2263
    %v2534 = vunpack.c.l.b16 %v2264
    %v2535 = vunpack.c.h.b16 %v2264
    %v2536 = vunpack.c.l.b16 %v2265
    %v2537 = vunpack.c.h.b16 %v2265
    %v2538 = vunpack.c.l.b16 %v2266
    %v2539 = vunpack.c.h.b16 %v2266
    %v2540 = vunpack.c.l.b16 %v2267
    %v2541 = vunpack.c.h.b16 %v2267
    %v2542 = vunpack.c.l.b16 %v2268
    %v2543 = vunpack.c.h.b16 %v2268
    %v2544 = vunpack.c.l.b16 %v2269
    %v2545 = vunpack.c.h.b16 %v2269
    %v2546 = vunpack.c.l.b16 %v2270
    %v2547 = vunpack.c.h.b16 %v2270
    %v2548 = vunpack.c.l.b16 %v2271
    %v2549 = vunpack.c.h.b16 %v2271
    %v2550 = vunpack.c.l.b16 %v2272
    %v2551 = vunpack.c.h.b16 %v2272
    %v2552 = vunpack.c.l.b16 %v2273
    %v2553 = vunpack.c.h.b16 %v2273
    %v2554 = vunpack.c.l.b16 %v2274
    %v2555 = vunpack.c.h.b16 %v2274
    %v2556 = vunpack.c.l.b16 %v2275
    %v2557 = vunpack.c.h.b16 %v2275
    %v2558 = vunpack.c.l.b16 %v2276
    %v2559 = vunpack.c.h.b16 %v2276
    %v2560 = vunpack.c.l.b16 %v2277
    %v2561 = vunpack.c.h.b16 %v2277
    %v2562 = vunpack.c.l.b16 %v2278
    %v2563 = vunpack.c.h.b16 %v2278
    %v2564 = vunpack.c.l.b16 %v2279
    %v2565 = vunpack.c.h.b16 %v2279
    %v2566 = vunpack.c.l.b16 %v2280
    %v2567 = vunpack.c.h.b16 %v2280
    %v2568 = vunpack.c.l.b16 %v2281
    %v2569 = vunpack.c.h.b16 %v2281
    %v2570 = vunpack.c.l.b16 %v2282
    %v2571 = vunpack.c.h.b16 %v2282
    %v2572 = vunpack.c.l.b16 %v2283
    %v2573 = vunpack.c.h.b16 %v2283
    %v2574 = vunpack.c.l.b16 %v2284
    %v2575 = vunpack.c.h.b16 %v2284
    %v2576 = vunpack.c.l.b16 %v2285
    %v2577 = vunpack.c.h.b16 %v2285
    %v2578 = vunpack.c.l.b16 %v2286
    %v2579 = vunpack.c.h.b16 %v2286
    %v2580 = vunpack.c.l.b16 %v2287
    %v2581 = vunpack.c.h.b16 %v2287
    %v2582 = vunpack.c.l.b16 %v2288
    %v2583 = vunpack.c.h.b16 %v2288
    %v2584 = vunpack.c.l.b16 %v2289
    %v2585 = vunpack.c.h.b16 %v2289
    %v2586 = vunpack.c.l.b16 %v2290
    %v2587 = vunpack.c.h.b16 %v2290
    %v2588 = vunpack.c.l.b16 %v2291
    %v2589 = vunpack.c.h.b16 %v2291
    %v2590 = vunpack.c.l.b16 %v2292
    %v2591 = vunpack.c.h.b16 %v2292
    %v2592 = vunpack.c.l.b16 %v2293
    %v2593 = vunpack.c.h.b16 %v2293
    %v2594 = vunpack.c.l.b16 %v2294
    %v2595 = vunpack.c.h.b16 %v2294
    %v2596 = vunpack.c.l.b16 %v2295
    %v2597 = vunpack.c.h.b16 %v2295
    %v2598 = vunpack.c.l.b16 %v2296
    %v2599 = vunpack.c.h.b16 %v2296
    %v2600 = vunpack.c.l.b16 %v2297
    %v2601 = vunpack.c.h.b16 %v2297
    %v2602 = vunpack.c.l.b16 %v2298
    %v2603 = vunpack.c.h.b16 %v2298
    %v2604 = vunpack.c.l.b16 %v2299
    %v2605 = vunpack.c.h.b16 %v2299
    %v2606 = vunpack.c.l.b16 %v2300
    %v2607 = vunpack.c.h.b16 %v2300
    %v2608 = vunpack.c.l.b16 %v2301
    %v2609 = vunpack.c.h.b16 %v2301
    %v2610 = vunpack.c.l.b16 %v2302
    %v2611 = vunpack.c.h.b16 %v2302
    %v2612 = vunpack.c.l.b16 %v2303
    %v2613 = vunpack.c.h.b16 %v2303
    %v2614 = vunpack.c.l.b16 %v2304
    %v2615 = vunpack.c.h.b16 %v2304
    %v2616 = vunpack.c.l.b16 %v2305
    %v2617 = vunpack.c.h.b16 %v2305
    %v2618 = vunpack.c.l.b16 %v2306
    %v2619 = vunpack.c.h.b16 %v2306
    %v2620 = vunpack.c.l.b16 %v2307
    %v2621 = vunpack.c.h.b16 %v2307
    %v2622 = vunpack.c.l.b16 %v2308
    %v2623 = vunpack.c.h.b16 %v2308
    %v2624 = vunpack.c.l.b16 %v2309
    %v2625 = vunpack.c.h.b16 %v2309
    %v2626 = vunpack.c.l.b16 %v2310
    %v2627 = vunpack.c.h.b16 %v2310
    %v2628 = vunpack.c.l.b16 %v2311
    %v2629 = vunpack.c.h.b16 %v2311
    %v2630 = vunpack.c.l.b16 %v2312
    %v2631 = vunpack.c.h.b16 %v2312
    %v2632 = vunpack.c.l.b16 %v2313
    %v2633 = vunpack.c.h.b16 %v2313
    %v2634 = vunpack.c.l.b16 %v2314
    %v2635 = vunpack.c.h.b16 %v2314
    %v2636 = vunpack.c.l.b16 %v2315
    %v2637 = vunpack.c.h.b16 %v2315
    %v2638 = vunpack.c.l.b16 %v2316
    %v2639 = vunpack.c.h.b16 %v2316
    %v2640 = vunpack.c.l.b16 %v2317
    %v2641 = vunpack.c.h.b16 %v2317
    %v2642 = vunpack.c.l.b16 %v2318
    %v2643 = vunpack.c.h.b16 %v2318
    %v2644 = vunpack.c.l.b16 %v2319
    %v2645 = vunpack.c.h.b16 %v2319
    %v2646 = vunpack.c.l.b16 %v2320
    %v2647 = vunpack.c.h.b16 %v2320
    %v2648 = vunpack.c.l.b16 %v2321
    %v2649 = vunpack.c.h.b16 %v2321
    %v2650 = vunpack.c.l.b16 %v2322
    %v2651 = vunpack.c.h.b16 %v2322
    %v2652 = vunpack.c.l.b16 %v2323
    %v2653 = vunpack.c.h.b16 %v2323
    %v2654 = vunpack.c.l.b16 %v2324
    %v2655 = vunpack.c.h.b16 %v2324
    %v2656 = vunpack.c.l.b16 %v2325
    %v2657 = vunpack.c.h.b16 %v2325
    %v2658 = vunpack.c.l.b16 %v2326
    %v2659 = vunpack.c.h.b16 %v2326
    %v2660 = vunpack.c.l.b16 %v2327
    %v2661 = vunpack.c.h.b16 %v2327
    %v2662 = vunpack.c.l.b16 %v2328
    %v2663 = vunpack.c.h.b16 %v2328
    %v2664 = vunpack.c.l.b16 %v2329
    %v2665 = vunpack.c.h.b16 %v2329
    %v2666 = vunpack.c.l.b16 %v2330
    %v2667 = vunpack.c.h.b16 %v2330
    %v2668 = vunpack.c.l.b16 %v2331
    %v2669 = vunpack.c.h.b16 %v2331
    %v2670 = vunpack.c.l.b16 %v2332
    %v2671 = vunpack.c.h.b16 %v2332
    %v2672 = vunpack.c.l.b16 %v2333
    %v2673 = vunpack.c.h.b16 %v2333
    %v2674 = vunpack.c.l.b16 %v2334
    %v2675 = vunpack.c.h.b16 %v2334
    %v2676 = vunpack.c.l.b16 %v2335
    %v2677 = vunpack.c.h.b16 %v2335
    %v2678 = vunpack.c.l.b16 %v2336
    %v2679 = vunpack.c.h.b16 %v2336
    %v2680 = vunpack.c.l.b16 %v2337
    %v2681 = vunpack.c.h.b16 %v2337
    %v2682 = vunpack.c.l.b16 %v2338
    %v2683 = vunpack.c.h.b16 %v2338
    %v2684 = vunpack.c.l.b16 %v2339
    %v2685 = vunpack.c.h.b16 %v2339
    %v2686 = vunpack.c.l.b16 %v2340
    %v2687 = vunpack.c.h.b16 %v2340
    %v2688 = vunpack.c.l.b16 %v2341
    %v2689 = vunpack.c.h.b16 %v2341
    %v2690 = vunpack.c.l.b16 %v2342
    %v2691 = vunpack.c.h.b16 %v2342
    %v2692 = vunpack.c.l.b16 %v2343
    %v2693 = vunpack.c.h.b16 %v2343
    %v2694 = vunpack.c.l.b16 %v2344
    %v2695 = vunpack.c.h.b16 %v2344
    %v2696 = vunpack.c.l.b16 %v2345
    %v2697 = vunpack.c.h.b16 %v2345
    %v2698 = vunpack.c.l.b16 %v2346
    %v2699 = vunpack.c.h.b16 %v2346
    %v2700 = vunpack.c.l.b16 %v2347
    %v2701 = vunpack.c.h.b16 %v2347
    %v2702 = vunpack.c.l.b16 %v2348
    %v2703 = vunpack.c.h.b16 %v2348
    %v2704 = vunpack.c.l.b16 %v2349
    %v2705 = vunpack.c.h.b16 %v2349
    %v2706 = vunpack.c.l.b16 %v2350
    %v2707 = vunpack.c.h.b16 %v2350
    %v2708 = vunpack.c.l.b16 %v2351
    %v2709 = vunpack.c.h.b16 %v2351
    %v2710 = vunpack.c.l.b16 %v2352
    %v2711 = vunpack.c.h.b16 %v2352
    %v2712 = vunpack.c.l.b16 %v2353
    %v2713 = vunpack.c.h.b16 %v2353
    %v2714 = vunpack.c.l.b16 %v2354
    %v2715 = vunpack.c.h.b16 %v2354
    %v2716 = vunpack.c.l.b16 %v2355
    %v2717 = vunpack.c.h.b16 %v2355
    %v2718 = vunpack.c.l.b16 %v2356
    %v2719 = vunpack.c.h.b16 %v2356
    %v2720 = vunpack.c.l.b16 %v2357
    %v2721 = vunpack.c.h.b16 %v2357
    %v2722 = vunpack.c.l.b16 %v2358
    %v2723 = vunpack.c.h.b16 %v2358
    %v2724 = vunpack.c.l.b16 %v2359
    %v2725 = vunpack.c.h.b16 %v2359
    %v2726 = vunpack.c.l.b16 %v2360
    %v2727 = vunpack.c.h.b16 %v2360
    %v2728 = vunpack.c.l.b16 %v2361
    %v2729 = vunpack.c.h.b16 %v2361
    %v2730 = vunpack.c.l.b16 %v2362
    %v2731 = vunpack.c.h.b16 %v2362
    %v2732 = vunpack.c.l.b16 %v2363
    %v2733 = vunpack.c.h.b16 %v2363
    %v2734 = vunpack.c.l.b16 %v2364
    %v2735 = vunpack.c.h.b16 %v2364
    %v2736 = vunpack.c.l.b16 %v2365
    %v2737 = vunpack.c.h.b16 %v2365
    %v2738 = vunpack.c.l.b16 %v2366
    %v2739 = vunpack.c.h.b16 %v2366
    %v2740 = vunpack.c.l.b16 %v2367
    %v2741 = vunpack.c.h.b16 %v2367
    %v2742 = vunpack.c.l.b16 %v2368
    %v2743 = vunpack.c.h.b16 %v2368
    %v2744 = vunpack.c.l.b16 %v2369
    %v2745 = vunpack.c.h.b16 %v2369
    %v2746 = vunpack.c.l.b16 %v2370
    %v2747 = vunpack.c.h.b16 %v2370
    %v2748 = vunpack.c.l.b16 %v2371
    %v2749 = vunpack.c.h.b16 %v2371
    %v2750 = vunpack.c.l.b16 %v2372
    %v2751 = vunpack.c.h.b16 %v2372
    %v2752 = vunpack.c.l.b16 %v2373
    %v2753 = vunpack.c.h.b16 %v2373
    %v2754 = vunpack.c.l.b16 %v2374
    %v2755 = vunpack.c.h.b16 %v2374
    %v2756 = vunpack.c.l.b16 %v2375
    %v2757 = vunpack.c.h.b16 %v2375
    %v2758 = vunpack.c.l.b16 %v2376
    %v2759 = vunpack.c.h.b16 %v2376
    %v2760 = vunpack.c.l.b16 %v2377
    %v2761 = vunpack.c.h.b16 %v2377
    %v2762 = vunpack.c.l.b16 %v2378
    %v2763 = vunpack.c.h.b16 %v2378
    %v2764 = vunpack.c.l.b16 %v2379
    %v2765 = vunpack.c.h.b16 %v2379
    %v2766 = vunpack.c.l.b16 %v2380
    %v2767 = vunpack.c.h.b16 %v2380
    %v2768 = vunpack.c.l.b16 %v2381
    %v2769 = vunpack.c.h.b16 %v2381
    %v2770 = vunpack.c.l.b16 %v2382
    %v2771 = vunpack.c.h.b16 %v2382
    %v2772 = vunpack.c.l.b16 %v2383
    %v2773 = vunpack.c.h.b16 %v2383
    %v2774 = vunpack.c.l.b16 %v2384
    %v2775 = vunpack.c.h.b16 %v2384
    %v2776 = vunpack.c.l.b16 %v2385
    %v2777 = vunpack.c.h.b16 %v2385
    %v2778 = vunpack.c.l.b16 %v2386
    %v2779 = vunpack.c.h.b16 %v2386
    %v2780 = vunpack.c.l.b16 %v2387
    %v2781 = vunpack.c.h.b16 %v2387
    %v2782 = vunpack.c.l.b16 %v2388
    %v2783 = vunpack.c.h.b16 %v2388
    %v2784 = vunpack.c.l.b16 %v2389
    %v2785 = vunpack.c.h.b16 %v2389
    %v2786 = vpack.c.b16 %v2532, %v2530
    %v2787 = vpack.c.b16 %v2533, %v2531
    %v2788 = vpack.c.b16 %v2536, %v2534
    %v2789 = vpack.c.b16 %v2537, %v2535
    %v2790 = vpack.c.b16 %v2540, %v2538
    %v2791 = vpack.c.b16 %v2541, %v2539
    %v2792 = vpack.c.b16 %v2544, %v2542
    %v2793 = vpack.c.b16 %v2545, %v2543
    %v2794 = vpack.c.b16 %v2548, %v2546
    %v2795 = vpack.c.b16 %v2549, %v2547
    %v2796 = vpack.c.b16 %v2552, %v2550
    %v2797 = vpack.c.b16 %v2553, %v2551
    %v2798 = vpack.c.b16 %v2556, %v2554
    %v2799 = vpack.c.b16 %v2557, %v2555
    %v2800 = vpack.c.b16 %v2560, %v2558
    %v2801 = vpack.c.b16 %v2561, %v2559
    %v2802 = vpack.c.b16 %v2564, %v2562
    %v2803 = vpack.c.b16 %v2565, %v2563
    %v2804 = vpack.c.b16 %v2568, %v2566
    %v2805 = vpack.c.b16 %v2569, %v2567
    %v2806 = vpack.c.b16 %v2572, %v2570
    %v2807 = vpack.c.b16 %v2573, %v2571
    %v2808 = vpack.c.b16 %v2576, %v2574
    %v2809 = vpack.c.b16 %v2577, %v2575
    %v2810 = vpack.c.b16 %v2580, %v2578
    %v2811 = vpack.c.b16 %v2581, %v2579
    %v2812 = vpack.c.b16 %v2584, %v2582
    %v2813 = vpack.c.b16 %v2585, %v2583
    %v2814 = vpack.c.b16 %v2588, %v2586
    %v2815 = vpack.c.b16 %v2589, %v2587
    %v2816 = vpack.c.b16 %v2592, %v2590
    %v2817 = vpack.c.b16 %v2593, %v2591
    %v2818 = vpack.c.b16 %v2596, %v2594
    %v2819 = vpack.c.b16 %v2597, %v2595
    %v2820 = vpack.c.b16 %v2600, %v2598
    %v2821 = vpack.c.b16 %v2601, %v2599
    %v2822 = vpack.c.b16 %v2604, %v2602
    %v2823 = vpack.c.b16 %v2605, %v2603
    %v2824 = vpack.c.b16 %v2608, %v2606
    %v2825 = vpack.c.b16 %v2609, %v2607
    %v2826 = vpack.c.b16 %v2612, %v2610
    %v2827 = vpack.c.b16 %v2613, %v2611
    %v2828 = vpack.c.b16 %v2616, %v2614
    %v2829 = vpack.c.b16 %v2617, %v2615
    %v2830 = vpack.c.b16 %v2620, %v2618
    %v2831 = vpack.c.b16 %v2621, %v2619
    %v2832 = vpack.c.b16 %v2624, %v2622
    %v2833 = vpack.c.b16 %v2625, %v2623
    %v2834 = vpack.c.b16 %v2628, %v2626
    %v2835 = vpack.c.b16 %v2629, %v2627
    %v2836 = vpack.c.b16 %v2632, %v2630
    %v2837 = vpack.c.b16 %v2633, %v2631
    %v2838 = vpack.c.b16 %v2636, %v2634
    %v2839 = vpack.c.b16 %v2637, %v2635
    %v2840 = vpack.c.b16 %v2640, %v2638
    %v2841 = vpack.c.b16 %v2641, %v2639
    %v2842 = vpack.c.b16 %v2644, %v2642
    %v2843 = vpack.c.b16 %v2645, %v2643
    %v2844 = vpack.c.b16 %v2648, %v2646
    %v2845 = vpack.c.b16 %v2649, %v2647
    %v2846 = vpack.c.b16 %v2652, %v2650
    %v2847 = vpack.c.b16 %v2653, %v2651
    %v2848 = vpack.c.b16 %v2656, %v2654
    %v2849 = vpack.c.b16 %v2657, %v2655
    %v2850 = vpack.c.b16 %v2660, %v2658
    %v2851 = vpack.c.b16 %v2661, %v2659
    %v2852 = vpack.c.b16 %v2664, %v2662
    %v2853 = vpack.c.b16 %v2665, %v2663
    %v2854 = vpack.c.b16 %v2668, %v2666
    %v2855 = vpack.c.b16 %v2669, %v2667
    %v2856 = vpack.c.b16 %v2672, %v2670
    %v2857 = vpack.c.b16 %v2673, %v2671
    %v2858 = vpack.c.b16 %v2676, %v2674
    %v2859 = vpack.c.b16 %v2677, %v2675
    %v2860 = vpack.c.b16 %v2680, %v2678
    %v2861 = vpack.c.b16 %v2681, %v2679
    %v2862 = vpack.c.b16 %v2684, %v2682
    %v2863 = vpack.c.b16 %v2685, %v2683
    %v2864 = vpack.c.b16 %v2688, %v2686
    %v2865 = vpack.c.b16 %v2689, %v2687
    %v2866 = vpack.c.b16 %v2692, %v2690
    %v2867 = vpack.c.b16 %v2693, %v2691
    %v2868 = vpack.c.b16 %v2696, %v2694
    %v2869 = vpack.c.b16 %v2697, %v2695
    %v2870 = vpack.c.b16 %v2700, %v2698
    %v2871 = vpack.c.b16 %v2701, %v2699
    %v2872 = vpack.c.b16 %v2704, %v2702
    %v2873 = vpack.c.b16 %v2705, %v2703
    %v2874 = vpack.c.b16 %v2708, %v2706
    %v2875 = vpack.c.b16 %v2709, %v2707
    %v2876 = vpack.c.b16 %v2712, %v2710
    %v2877 = vpack.c.b16 %v2713, %v2711
    %v2878 = vpack.c.b16 %v2716, %v2714
    %v2879 = vpack.c.b16 %v2717, %v2715
    %v2880 = vpack.c.b16 %v2720, %v2718
    %v2881 = vpack.c.b16 %v2721, %v2719
    %v2882 = vpack.c.b16 %v2724, %v2722
    %v2883 = vpack.c.b16 %v2725, %v2723
    %v2884 = vpack.c.b16 %v2728, %v2726
    %v2885 = vpack.c.b16 %v2729, %v2727
    %v2886 = vpack.c.b16 %v2732, %v2730
    %v2887 = vpack.c.b16 %v2733, %v2731
    %v2888 = vpack.c.b16 %v2736, %v2734
    %v2889 = vpack.c.b16 %v2737, %v2735
    %v2890 = vpack.c.b16 %v2740, %v2738
    %v2891 = vpack.c.b16 %v2741, %v2739
    %v2892 = vpack.c.b16 %v2744, %v2742
    %v2893 = vpack.c.b16 %v2745, %v2743
    %v2894 = vpack.c.b16 %v2748, %v2746
    %v2895 = vpack.c.b16 %v2749, %v2747
    %v2896 = vpack.c.b16 %v2752, %v2750
    %v2897 = vpack.c.b16 %v2753, %v2751
    %v2898 = vpack.c.b16 %v2756, %v2754
    %v2899 = vpack.c.b16 %v2757, %v2755
    %v2900 = vpack.c.b16 %v2760, %v2758
    %v2901 = vpack.c.b16 %v2761, %v2759
    %v2902 = vpack.c.b16 %v2764, %v2762
    %v2903 = vpack.c.b16 %v2765, %v2763
    %v2904 = vpack.c.b16 %v2768, %v2766
    %v2905 = vpack.c.b16 %v2769, %v2767
    %v2906 = vpack.c.b16 %v2772, %v2770
    %v2907 = vpack.c.b16 %v2773, %v2771
    %v2908 = vpack.c.b16 %v2776, %v2774
    %v2909 = vpack.c.b16 %v2777, %v2775
    %v2910 = vpack.c.b16 %v2780, %v2778
    %v2911 = vpack.c.b16 %v2781, %v2779
    %v2912 = vpack.c.b16 %v2784, %v2782
    %v2913 = vpack.c.b16 %v2785, %v2783
    %3042 = vmatprep.subr.bf16.mxu0 %v2787
    %3043 = vmatpush1.bf16.msra.mxu0 %v2786
    %3044 = vmatprep.subr.bf16.mxu0 %v2789
    %3045 = vmatpush1.bf16.msra.mxu0 %v2788
    %3046 = vmatprep.subr.bf16.mxu0 %v2791
    %3047 = vmatpush1.bf16.msra.mxu0 %v2790
    %3048 = vmatprep.subr.bf16.mxu0 %v2793
    %3049 = vmatpush1.bf16.msra.mxu0 %v2792
    %3050 = vmatprep.subr.bf16.mxu0 %v2795
    %3051 = vmatpush1.bf16.msra.mxu0 %v2794
    %3052 = vmatprep.subr.bf16.mxu0 %v2797
    %3053 = vmatpush1.bf16.msra.mxu0 %v2796
    %3054 = vmatprep.subr.bf16.mxu0 %v2799
    %3055 = vmatpush1.bf16.msra.mxu0 %v2798
    %3056 = vmatprep.subr.bf16.mxu0 %v2801
    %3057 = vmatpush1.bf16.msra.mxu0 %v2800
    %3058 = vmatprep.subr.bf16.mxu0 %v2803
    %3059 = vmatpush1.bf16.msra.mxu0 %v2802
    %3060 = vmatprep.subr.bf16.mxu0 %v2805
    %3061 = vmatpush1.bf16.msra.mxu0 %v2804
    %3062 = vmatprep.subr.bf16.mxu0 %v2807
    %3063 = vmatpush1.bf16.msra.mxu0 %v2806
    %3064 = vmatprep.subr.bf16.mxu0 %v2809
    %3065 = vmatpush1.bf16.msra.mxu0 %v2808
    %3066 = vmatprep.subr.bf16.mxu0 %v2811
    %3067 = vmatpush1.bf16.msra.mxu0 %v2810
    %3068 = vmatprep.subr.bf16.mxu0 %v2813
    %3069 = vmatpush1.bf16.msra.mxu0 %v2812
    %3070 = vmatprep.subr.bf16.mxu0 %v2815
    %3071 = vmatpush1.bf16.msra.mxu0 %v2814
    %3072 = vmatprep.subr.bf16.mxu0 %v2817
    %3073 = vmatpush1.bf16.msra.mxu0 %v2816
    %3074 = vmatprep.mubr.bf16.mxu0 %v2255
    %3075 = vmatmul.mubr.bf16.gmra.mrb[0].mxu0 %v2254
    %v3076 = vpop.f32.mrb[0].mxu0
    %v3077 = vadd.f32 %v2395, %v3076
    %v3078 = vpop.f32.mrb[0].mxu0
    %v3079 = vadd.f32 %v2399, %v3078
    %v3080 = vpop.f32.mrb[0].mxu0
    %v3081 = vpop.f32.mrb[0].mxu0
    %3082 = vdwg.mxu0
    %3083 = vmatprep.subr.bf16.mxu0 %v2819
    %3084 = vmatpush1.bf16.msra.mxu0 %v2818
    %3085 = vmatprep.subr.bf16.mxu0 %v2821
    %3086 = vmatpush1.bf16.msra.mxu0 %v2820
    %3087 = vmatprep.subr.bf16.mxu0 %v2823
    %3088 = vmatpush1.bf16.msra.mxu0 %v2822
    %3089 = vmatprep.subr.bf16.mxu0 %v2825
    %3090 = vmatpush1.bf16.msra.mxu0 %v2824
    %3091 = vmatprep.subr.bf16.mxu0 %v2827
    %3092 = vmatpush1.bf16.msra.mxu0 %v2826
    %3093 = vmatprep.subr.bf16.mxu0 %v2829
    %3094 = vmatpush1.bf16.msra.mxu0 %v2828
    %3095 = vmatprep.subr.bf16.mxu0 %v2831
    %3096 = vmatpush1.bf16.msra.mxu0 %v2830
    %3097 = vmatprep.subr.bf16.mxu0 %v2833
    %3098 = vmatpush1.bf16.msra.mxu0 %v2832
    %3099 = vmatprep.subr.bf16.mxu0 %v2835
    %3100 = vmatpush1.bf16.msra.mxu0 %v2834
    %3101 = vmatprep.subr.bf16.mxu0 %v2837
    %3102 = vmatpush1.bf16.msra.mxu0 %v2836
    %3103 = vmatprep.subr.bf16.mxu0 %v2839
    %3104 = vmatpush1.bf16.msra.mxu0 %v2838
    %3105 = vmatprep.subr.bf16.mxu0 %v2841
    %3106 = vmatpush1.bf16.msra.mxu0 %v2840
    %3107 = vmatprep.subr.bf16.mxu0 %v2843
    %3108 = vmatpush1.bf16.msra.mxu0 %v2842
    %3109 = vmatprep.subr.bf16.mxu0 %v2845
    %3110 = vmatpush1.bf16.msra.mxu0 %v2844
    %3111 = vmatprep.subr.bf16.mxu0 %v2847
    %3112 = vmatpush1.bf16.msra.mxu0 %v2846
    %3113 = vmatprep.subr.bf16.mxu0 %v2849
    %3114 = vmatpush1.bf16.msra.mxu0 %v2848
    %3115 = vmatprep.mubr.bf16.mxu0 %v2257
    %3116 = vmatmul.mubr.bf16.gmra.mrb[0].mxu0 %v2256
    %v3117 = vpop.f32.mrb[0].mxu0
    %v3118 = vadd.f32 %v3077, %v3117
    %v3119 = vpop.f32.mrb[0].mxu0
    %v3120 = vadd.f32 %v3079, %v3119
    %v3121 = vpop.f32.mrb[0].mxu0
    %v3122 = vpop.f32.mrb[0].mxu0
    %3123 = vdwg.mxu0
    %3124 = vmatprep.subr.bf16.mxu0 %v2851
    %3125 = vmatpush1.bf16.msra.mxu0 %v2850
    %3126 = vmatprep.subr.bf16.mxu0 %v2853
    %3127 = vmatpush1.bf16.msra.mxu0 %v2852
    %3128 = vmatprep.subr.bf16.mxu0 %v2855
    %3129 = vmatpush1.bf16.msra.mxu0 %v2854
    %3130 = vmatprep.subr.bf16.mxu0 %v2857
    %3131 = vmatpush1.bf16.msra.mxu0 %v2856
    %3132 = vmatprep.subr.bf16.mxu0 %v2859
    %3133 = vmatpush1.bf16.msra.mxu0 %v2858
    %3134 = vmatprep.subr.bf16.mxu0 %v2861
    %3135 = vmatpush1.bf16.msra.mxu0 %v2860
    %3136 = vmatprep.subr.bf16.mxu0 %v2863
    %3137 = vmatpush1.bf16.msra.mxu0 %v2862
    %3138 = vmatprep.subr.bf16.mxu0 %v2865
    %3139 = vmatpush1.bf16.msra.mxu0 %v2864
    %3140 = vmatprep.subr.bf16.mxu0 %v2867
    %3141 = vmatpush1.bf16.msra.mxu0 %v2866
    %3142 = vmatprep.subr.bf16.mxu0 %v2869
    %3143 = vmatpush1.bf16.msra.mxu0 %v2868
    %3144 = vmatprep.subr.bf16.mxu0 %v2871
    %3145 = vmatpush1.bf16.msra.mxu0 %v2870
    %3146 = vmatprep.subr.bf16.mxu0 %v2873
    %3147 = vmatpush1.bf16.msra.mxu0 %v2872
    %3148 = vmatprep.subr.bf16.mxu0 %v2875
    %3149 = vmatpush1.bf16.msra.mxu0 %v2874
    %3150 = vmatprep.subr.bf16.mxu0 %v2877
    %3151 = vmatpush1.bf16.msra.mxu0 %v2876
    %3152 = vmatprep.subr.bf16.mxu0 %v2879
    %3153 = vmatpush1.bf16.msra.mxu0 %v2878
    %3154 = vmatprep.subr.bf16.mxu0 %v2881
    %3155 = vmatpush1.bf16.msra.mxu0 %v2880
    %3156 = vmatprep.mubr.bf16.mxu0 %v2259
    %3157 = vmatmul.mubr.bf16.gmra.mrb[0].mxu0 %v2258
    %v3158 = vpop.f32.mrb[0].mxu0
    %v3159 = vadd.f32 %v3118, %v3158
    %v3160 = vpop.f32.mrb[0].mxu0
    %v3161 = vadd.f32 %v3120, %v3160
    %v3162 = vpop.f32.mrb[0].mxu0
    %v3163 = vpop.f32.mrb[0].mxu0
    %3164 = vdwg.mxu0
    %3165 = vmatprep.subr.bf16.mxu0 %v2883
    %3166 = vmatpush1.bf16.msra.mxu0 %v2882
    %3167 = vmatprep.subr.bf16.mxu0 %v2885
    %3168 = vmatpush1.bf16.msra.mxu0 %v2884
    %3169 = vmatprep.subr.bf16.mxu0 %v2887
    %3170 = vmatpush1.bf16.msra.mxu0 %v2886
    %3171 = vmatprep.subr.bf16.mxu0 %v2889
    %3172 = vmatpush1.bf16.msra.mxu0 %v2888
    %3173 = vmatprep.subr.bf16.mxu0 %v2891
    %3174 = vmatpush1.bf16.msra.mxu0 %v2890
    %3175 = vmatprep.subr.bf16.mxu0 %v2893
    %3176 = vmatpush1.bf16.msra.mxu0 %v2892
    %3177 = vmatprep.subr.bf16.mxu0 %v2895
    %3178 = vmatpush1.bf16.msra.mxu0 %v2894
    %3179 = vmatprep.subr.bf16.mxu0 %v2897
    %3180 = vmatpush1.bf16.msra.mxu0 %v2896
    %3181 = vmatprep.subr.bf16.mxu0 %v2899
    %3182 = vmatpush1.bf16.msra.mxu0 %v2898
    %3183 = vmatprep.subr.bf16.mxu0 %v2901
    %3184 = vmatpush1.bf16.msra.mxu0 %v2900
    %3185 = vmatprep.subr.bf16.mxu0 %v2903
    %3186 = vmatpush1.bf16.msra.mxu0 %v2902
    %3187 = vmatprep.subr.bf16.mxu0 %v2905
    %3188 = vmatpush1.bf16.msra.mxu0 %v2904
    %3189 = vmatprep.subr.bf16.mxu0 %v2907
    %3190 = vmatpush1.bf16.msra.mxu0 %v2906
    %3191 = vmatprep.subr.bf16.mxu0 %v2909
    %3192 = vmatpush1.bf16.msra.mxu0 %v2908
    %3193 = vmatprep.subr.bf16.mxu0 %v2911
    %3194 = vmatpush1.bf16.msra.mxu0 %v2910
    %3195 = vmatprep.subr.bf16.mxu0 %v2913
    %3196 = vmatpush1.bf16.msra.mxu0 %v2912
    %3197 = vmatprep.mubr.bf16.mxu0 %v2261
    %3198 = vmatmul.mubr.bf16.gmra.mrb[0].mxu0 %v2260
    %v3199 = vpop.f32.mrb[0].mxu0
    %v3200 = vadd.f32 %v3159, %v3199
    %v3201 = vpop.f32.mrb[0].mxu0
    %v3202 = vadd.f32 %v3161, %v3201
    %v3203 = vpop.f32.mrb[0].mxu0
    %v3204 = vpop.f32.mrb[0].mxu0
    %3205 = vdwg.mxu0
    %v3206 = vxor.u32 %v3200, 2147483648
    %v3207 = vxor.u32 %v3202, 2147483648
    %v3208 = vmul.f32 %v3206, 1.442695
    %v3209 = vpow.pop %v3208
    %v3210 = vmul.f32 %v3207, 1.442695
    %v3211 = vpow.pop %v3210
    %v3212 = vadd.f32 %v3209, 1.0
    %v3213 = vadd.f32 %v3211, 1.0
    %v3214 = vrcp.pop %v3212
    %v3215 = vmul.f32 1.0, %v3214
    %v3216 = vrcp.pop %v3213
    %v3217 = vmul.f32 1.0, %v3216
    %3218 = vst [vmem:[#allocation10] sm:$0xff] %v3215
    %3219 = vst [vmem:[#allocation10 + $0x8] sm:$0xff] %v3217
    // Predicated region
    $region50: #{tpu_custom_call.1} parent=1 // pred_check
      _
    $region51: #{tpu_custom_call.1} parent=1 // pred_check_branch
      %3221 = sbr.rel (0) target = $region53
    $region52: #{tpu_custom_call.1} parent=1 // pred_region
      %s3223 = ssub.s32 256, 256
      %3224 = vsyncadd [#allocation4], %s3223
      %s3226 = sshll.u32 [#allocation10], 4
      %s3227 = int_to_ptr.vmem [resolvable:$true] %s3226
      %3229 = dma.vmem_to_hbm [thread:$0]  %s3227, 256, %s8, [#allocation4]
    $region53: #{tpu_custom_call.1} parent=1 // pred_fallthru
      _
    // Predicated region
    $region54: #{tpu_custom_call.1} parent=1 // pred_check
      _
    $region55: #{tpu_custom_call.1} parent=1 // pred_check_branch
      %3231 = sbr.rel (0) target = $region57
    $region56: #{tpu_custom_call.1} parent=1 // pred_region
      %3232 = dma.done [#allocation4], 256
    $region57: #{tpu_custom_call.1} parent=1 // pred_fallthru
      _
    %3233 = vsyncpa [#allocation3], 1
    %3234 = vsyncpa [#allocation6], 1
    %3235 = vsyncpa [#allocation9], 1
    %3236 = vsyncpa [#allocation4], 1

</llo_original>
